<compile_context>
chip_gen: v5e
topology: v5e:2x2
jax: 0.10.0
libtpu: 0.0.40
codegen_flags: <defaults>
</compile_context>

<pallas_src>
import jax
import jax.numpy as jnp
from jax import lax
from jax.experimental import pallas as pl
from jax.experimental.pallas import tpu as pltpu


# ----------------------------------------------------------------------------
# Fused Pallas kernel
# ----------------------------------------------------------------------------
def _make_vae_kernel(n_batch, latent_dims):
    f32, bf16 = jnp.float32, jnp.bfloat16
    N, L = n_batch, latent_dims
    R1, R2, R3 = N * 16, N * 8, N * 4          # padded row counts per stage
    BN_INV = 1.0 / float(N * 7 * 7)            # valid elements per channel

    def kernel(xp_ref, m1_ref, m2_ref, m3_ref, w4_ref, wh_ref, a2_ref,
               bias_ref, eps_ref, z_ref, kl_ref, h1_ref, h2_ref, h3_ref):

        bp = bias_ref[...]                                     # (8, 128) f32

        def conv3dots(src_ref, m_ref, rows):
            # 3x3 stride-2 conv: 3 strided row reads (vld) + 3 MXU dots.
            # Row layout of src was arranged so offset i needs rows i, i+2, ...
            acc = None
            for i in range(3):
                sel = src_ref[pl.ds(i, rows, stride=2), :].astype(bf16)
                part = jnp.dot(sel, m_ref[i], preferred_element_type=f32)
                acc = part if acc is None else acc + part
            return acc

        # ---- conv1 (3->8, k3 s2 p1) + ReLU; 16 rows/sample (rows 1..14 valid) ----
        h1 = jnp.maximum(conv3dots(xp_ref, m1_ref, R1) + bp[0:1, :112], 0.0)
        p1 = lax.broadcasted_iota(jnp.int32, (R1, 1), 0) & 15
        h1 = jnp.where((p1 >= 1) & (p1 <= 14), h1, 0.0)        # zero the pad rows
        h1_ref[pl.ds(0, R1), :] = h1
        h1_ref[pl.ds(R1, 8), :] = jnp.zeros((8, 112), f32)     # read-overhang rows

        # ---- conv2 (8->16) + BatchNorm2d (batch stats) + ReLU; 8 rows/sample ----
        y2 = conv3dots(h1_ref, m2_ref, R2) + bp[1:2, :112]
        p2 = lax.broadcasted_iota(jnp.int32, (R2, 1), 0) & 7
        y2v = jnp.where(p2 < 7, y2, 0.0)                       # mask pad rows in stats
        rs = jnp.sum(y2v, axis=0, keepdims=True)               # exact f32 XLU sums
        rs2 = jnp.sum(y2v * y2v, axis=0, keepdims=True)
        mean = jnp.dot(rs, a2_ref[...], preferred_element_type=f32) * BN_INV
        ex2 = jnp.dot(rs2, a2_ref[...], preferred_element_type=f32) * BN_INV
        var = ex2 - mean * mean                                # biased batch variance
        h2 = jnp.maximum((y2 - mean) * lax.rsqrt(var + 1e-5) * bp[2:3, :112]
                         + bp[3:4, :112], 0.0)
        h2_ref[pl.ds(0, R2), :] = h2
        h2_ref[pl.ds(R2, 8), :] = jnp.zeros((8, 112), f32)

        # ---- conv3 (16->32, k3 s2 p0) + ReLU; 4 rows/sample (rows 0..2 valid) ----
        h3_ref[...] = jnp.maximum(conv3dots(h2_ref, m3_ref, R3) + bp[4:5, :96],
                                  0.0)

        # ---- torch.flatten + linear1 + ReLU: 3 strided gathers + 3 dots ----
        acc = None
        for oh in range(3):
            sel = h3_ref[pl.ds(oh, N, stride=4), :].astype(bf16)
            part = jnp.dot(sel, w4_ref[oh], preferred_element_type=f32)
            acc = part if acc is None else acc + part
        h4 = jnp.maximum(acc + bp[5:6, :], 0.0)                # (N, 128)

        # ---- fused mu / log-sigma heads, reparameterization, KL ----
        out = (jnp.dot(h4.astype(bf16), wh_ref[...], preferred_element_type=f32)
               + bp[6:7, :2 * L])
        mu = out[:, :L]
        logsig = out[:, L:2 * L]
        sigma = jnp.exp(logsig)
        z_ref[...] = mu + sigma * eps_ref[...]
        kl_ref[...] = jnp.sum(sigma * sigma + mu * mu - logsig - 0.5,
                              keepdims=True)

    return kernel


def _vmem():
    return pl.BlockSpec(memory_space=pltpu.MemorySpace.VMEM)


# ----------------------------------------------------------------------------
# Wrapper glue (runs under jit): fold conv weights / strides into lane matrices
# ----------------------------------------------------------------------------
def _conv_width_matrix(w_i, w_in, ow_out, stride, pad):
    """(w_in*c_in, ow_out*c_out) matrix folding width stride/padding and the conv
    weights at one kernel-height offset.  w_i: (KW, C_in, C_out)."""
    kw = w_i.shape[0]
    w_idx = jnp.arange(w_in)
    ow_idx = jnp.arange(ow_out)
    j = w_idx[:, None] - (stride * ow_idx[None, :] - pad)       # (w_in, ow_out)
    valid = (j >= 0) & (j < kw)
    blocks = w_i[jnp.clip(j, 0, kw - 1)]                        # (w_in, ow, Ci, Co)
    blocks = blocks * valid[:, :, None, None].astype(w_i.dtype)
    c_in, c_out = w_i.shape[1], w_i.shape[2]
    return jnp.transpose(blocks, (0, 2, 1, 3)).reshape(w_in * c_in,
                                                       ow_out * c_out)


@jax.jit
def variational_encoder_forward(x_nchw, params, eps):
    """Mirrors VariationalEncoder.forward.  x_nchw: (N, 3, 28, 28) f32.
    Returns (z, kl)."""
    f32, bf16 = jnp.float32, jnp.bfloat16
    N = x_nchw.shape[0]
    L = eps.shape[1]

    # conv-stack geometry for 28x28 inputs: 28 -> 14 -> 7 -> 3
    H0, H1, H2, H3 = 28, 14, 7, 3
    C0, C2, C3 = 3, 16, 32

    # NCHW -> NHWC -> per-sample (H, W*C); pad H to [3 zero | 28 data | 1 zero] = 32
    # so every conv stage reduces to three stride-2 row reads starting at 0/1/2.
    x_nhwc = jnp.transpose(x_nchw, (0, 2, 3, 1)).reshape(N, H0, H0 * C0)
    xp = jnp.pad(x_nhwc, ((0, 0), (3, 1), (0, 0))).reshape(N * 32, H0 * C0)
    xp = jnp.pad(xp, ((0, 8), (0, 0))).astype(f32)              # read-overhang rows

    def conv_mats(w_oihw, w_in, ow, stride, pad):
        wt = jnp.transpose(w_oihw, (2, 3, 1, 0))                # (KH, KW, IC, OC)
        return jnp.stack([_conv_width_matrix(wt[i], w_in, ow, stride, pad)
                          for i in range(3)]).astype(bf16)

    m1 = conv_mats(params['w1'], H0, H1, 2, 1)                  # (3,  84, 112)
    m2 = conv_mats(params['w2'], H1, H2, 2, 1)                  # (3, 112, 112)
    m3 = conv_mats(params['w3'], H2, H3, 2, 0)                  # (3, 112,  96)

    # torch.flatten(NCHW): flat index = c*9 + oh*3 + ow ; kernel lane = ow*32 + c
    wl1 = params['wl1'].T.reshape(C3, H3, H3, 128)
    w4 = jnp.stack([jnp.transpose(wl1[:, oh], (1, 0, 2)).reshape(H3 * C3, 128)
                    for oh in range(H3)]).astype(bf16)          # (3, 96, 128)

    wh = jnp.concatenate([params['wl2'].T, params['wl3'].T], axis=1).astype(bf16)

    a2 = jnp.tile(jnp.eye(C2, dtype=f32), (H2, H2))             # (112, 112)

    def lane_row(v, reps):
        row = jnp.tile(v, reps)
        return jnp.pad(row, (0, 128 - row.shape[0]))

    bias_pack = jnp.stack([
        lane_row(params['b1'], H1),                             # row 0: conv1 bias
        lane_row(params['b2'], H2),                             # row 1: conv2 bias
        lane_row(params['gamma'], H2),                          # row 2: BN gamma
        lane_row(params['beta'], H2),                           # row 3: BN beta
        lane_row(params['b3'], H3),                             # row 4: conv3 bias
        lane_row(params['bl1'], 1),                             # row 5: linear1 bias
        lane_row(jnp.concatenate([params['bl2'], params['bl3']]), 1),   # row 6
        jnp.zeros((128,), f32),
    ]).astype(f32)                                              # (8, 128)

    kernel = _make_vae_kernel(N, L)

    nbytes = lambda a: int(a.size) * a.dtype.itemsize
    flops = 2 * (16 * N * 84 * 112 * 3 + 8 * N * 112 * 112 * 3
                 + 2 * 112 * 112 + 4 * N * 112 * 96 * 3
                 + N * 96 * 128 * 3 + N * 128 * 2 * L)
    cost = pl.CostEstimate(
        flops=flops,
        transcendentals=N * L + 112,
        bytes_accessed=sum(nbytes(a) for a in
                           (xp, m1, m2, m3, w4, wh, a2, bias_pack, eps))
        + N * L * 4 + 4)

    z, kl = pl.pallas_call(
        kernel,
        out_shape=(jax.ShapeDtypeStruct((N, L), f32),
                   jax.ShapeDtypeStruct((1, 1), f32)),
        in_specs=[_vmem()] * 9,
        out_specs=(_vmem(), _vmem()),
        scratch_shapes=[pltpu.VMEM((N * 16 + 8, 112), f32),     # h1 (padded rows)
                        pltpu.VMEM((N * 8 + 8, 112), f32),      # h2 (padded rows)
                        pltpu.VMEM((N * 4, 96), f32)],          # h3
        cost_estimate=cost,
    )(xp, m1, m2, m3, w4, wh, a2, bias_pack, eps.astype(f32))
    return z, kl[0, 0]


# ----------------------------------------------------------------------------
# Parameters (PyTorch-native layouts: conv (OC,IC,KH,KW), linear (out,in))
# ----------------------------------------------------------------------------
def init_params(key, latent_dims):
    ks = jax.random.split(key, 12)
    s = 0.1
    p = {}
    p['w1'] = jax.random.normal(ks[0], (8, 3, 3, 3), jnp.float32) * s
    p['b1'] = jax.random.normal(ks[1], (8,), jnp.float32) * s
    p['w2'] = jax.random.normal(ks[2], (16, 8, 3, 3), jnp.float32) * s
    p['b2'] = jax.random.normal(ks[3], (16,), jnp.float32) * s
    p['gamma'] = jnp.ones((16,), jnp.float32)        # BatchNorm2d default init
    p['beta'] = jnp.zeros((16,), jnp.float32)
    p['w3'] = jax.random.normal(ks[4], (32, 16, 3, 3), jnp.float32) * s
    p['b3'] = jax.random.normal(ks[5], (32,), jnp.float32) * s
    p['wl1'] = jax.random.normal(ks[6], (128, 288), jnp.float32) * s
    p['bl1'] = jax.random.normal(ks[7], (128,), jnp.float32) * s
    p['wl2'] = jax.random.normal(ks[8], (latent_dims, 128), jnp.float32) * s
    p['bl2'] = jax.random.normal(ks[9], (latent_dims,), jnp.float32) * s
    p['wl3'] = jax.random.normal(ks[10], (latent_dims, 128), jnp.float32) * s
    p['bl3'] = jax.random.normal(ks[11], (latent_dims,), jnp.float32) * s
    return p


if __name__ == "__main__":
    LATENT_DIMS = 8
    key = jax.random.PRNGKey(0)
    k_x, k_p, k_eps = jax.random.split(key, 3)

    x = jax.random.normal(k_x, (2, 3, 28, 28), jnp.float32)
    params = init_params(k_p, LATENT_DIMS)
    # stands in for torch.distributions.Normal(0,1).sample(mu.shape)
    eps = jax.random.normal(k_eps, (2, LATENT_DIMS), jnp.float32)

    z, kl = variational_encoder_forward(x, params, eps)
    z = jax.block_until_ready(z)
    kl = jax.block_until_ready(kl)
    assert z.shape == (2, LATENT_DIMS) and z.dtype == jnp.float32
    assert kl.shape == () and bool(jnp.isfinite(kl))
    print("KERNEL_OK")
</pallas_src>

<mosaic_0001>
module attributes {stable_mosaic.version = 11 : i64} {
  func.func @kernel(%arg0: memref<72x84xf32, #tpu.memory_space<vmem>>, %arg1: memref<3x84x112xbf16, #tpu.memory_space<vmem>>, %arg2: memref<3x112x112xbf16, #tpu.memory_space<vmem>>, %arg3: memref<3x112x96xbf16, #tpu.memory_space<vmem>>, %arg4: memref<3x96x128xbf16, #tpu.memory_space<vmem>>, %arg5: memref<128x16xbf16, #tpu.memory_space<vmem>>, %arg6: memref<112x112xf32, #tpu.memory_space<vmem>>, %arg7: memref<8x128xf32, #tpu.memory_space<vmem>>, %arg8: memref<2x8xf32, #tpu.memory_space<vmem>>, %arg9: memref<2x8xf32, #tpu.memory_space<vmem>>, %arg10: memref<1x1xf32, #tpu.memory_space<vmem>>, %arg11: memref<40x112xf32, #tpu.memory_space<vmem>>, %arg12: memref<24x112xf32, #tpu.memory_space<vmem>>, %arg13: memref<8x96xf32, #tpu.memory_space<vmem>>) attributes {dimension_semantics = [], scalar_prefetch = 0 : i64, scratch_operands = 3 : i64, tpu.core_type = #tpu.core_type<tc>} {
    %c0 = arith.constant 0 : index
    %c0_0 = arith.constant 0 : index
    %0 = vector.load %arg7[%c0, %c0_0] : memref<8x128xf32, #tpu.memory_space<vmem>>, vector<8x128xf32>
    %c0_1 = arith.constant 0 : index
    %c0_2 = arith.constant 0 : index
    %1 = tpu.strided_load %arg0[%c0_1, %c0_2] {strides = array<i32: 2, 1>} : memref<72x84xf32, #tpu.memory_space<vmem>>, vector<32x84xf32>
    %2 = arith.truncf %1 : vector<32x84xf32> to vector<32x84xbf16>
    %c0_3 = arith.constant 0 : index
    %c0_4 = arith.constant 0 : index
    %c0_5 = arith.constant 0 : index
    %3 = vector.load %arg1[%c0_3, %c0_4, %c0_5] : memref<3x84x112xbf16, #tpu.memory_space<vmem>>, vector<1x84x112xbf16>
    %4 = vector.shape_cast %3 : vector<1x84x112xbf16> to vector<84x112xbf16>
    %cst = arith.constant dense<0.000000e+00> : vector<32x112xf32>
    %5 = tpu.matmul %2, %4, %cst {dimension_numbers = #tpu.dot_dimension_numbers<[1], [0], [0], [1], [0, 0, 1, 1], [], []>} : vector<32x84xbf16>, vector<84x112xbf16>, vector<32x112xf32> -> vector<32x112xf32>
    %c1 = arith.constant 1 : index
    %c0_6 = arith.constant 0 : index
    %6 = tpu.strided_load %arg0[%c1, %c0_6] {strides = array<i32: 2, 1>} : memref<72x84xf32, #tpu.memory_space<vmem>>, vector<32x84xf32>
    %7 = arith.truncf %6 : vector<32x84xf32> to vector<32x84xbf16>
    %c1_7 = arith.constant 1 : index
    %c0_8 = arith.constant 0 : index
    %c0_9 = arith.constant 0 : index
    %8 = vector.load %arg1[%c1_7, %c0_8, %c0_9] : memref<3x84x112xbf16, #tpu.memory_space<vmem>>, vector<1x84x112xbf16>
    %9 = vector.shape_cast %8 : vector<1x84x112xbf16> to vector<84x112xbf16>
    %cst_10 = arith.constant dense<0.000000e+00> : vector<32x112xf32>
    %10 = tpu.matmul %7, %9, %cst_10 {dimension_numbers = #tpu.dot_dimension_numbers<[1], [0], [0], [1], [0, 0, 1, 1], [], []>} : vector<32x84xbf16>, vector<84x112xbf16>, vector<32x112xf32> -> vector<32x112xf32>
    %11 = arith.addf %5, %10 : vector<32x112xf32>
    %c2 = arith.constant 2 : index
    %c0_11 = arith.constant 0 : index
    %12 = tpu.strided_load %arg0[%c2, %c0_11] {strides = array<i32: 2, 1>} : memref<72x84xf32, #tpu.memory_space<vmem>>, vector<32x84xf32>
    %13 = arith.truncf %12 : vector<32x84xf32> to vector<32x84xbf16>
    %c2_12 = arith.constant 2 : index
    %c0_13 = arith.constant 0 : index
    %c0_14 = arith.constant 0 : index
    %14 = vector.load %arg1[%c2_12, %c0_13, %c0_14] : memref<3x84x112xbf16, #tpu.memory_space<vmem>>, vector<1x84x112xbf16>
    %15 = vector.shape_cast %14 : vector<1x84x112xbf16> to vector<84x112xbf16>
    %cst_15 = arith.constant dense<0.000000e+00> : vector<32x112xf32>
    %16 = tpu.matmul %13, %15, %cst_15 {dimension_numbers = #tpu.dot_dimension_numbers<[1], [0], [0], [1], [0, 0, 1, 1], [], []>} : vector<32x84xbf16>, vector<84x112xbf16>, vector<32x112xf32> -> vector<32x112xf32>
    %17 = arith.addf %11, %16 : vector<32x112xf32>
    %18 = vector.extract_strided_slice %0 {offsets = [0, 0], sizes = [1, 112], strides = [1, 1]} : vector<8x128xf32> to vector<1x112xf32>
    %19 = vector.broadcast %18 : vector<1x112xf32> to vector<32x112xf32>
    %20 = arith.addf %17, %19 : vector<32x112xf32>
    %cst_16 = arith.constant 0.000000e+00 : f32
    %21 = vector.broadcast %cst_16 : f32 to vector<32x112xf32>
    %22 = arith.maximumf %20, %21 : vector<32x112xf32>
    %23 = tpu.iota {dimensions = array<i32: 0>} : vector<32x1xi32>
    %c15_i32 = arith.constant 15 : i32
    %24 = vector.broadcast %c15_i32 : i32 to vector<32x1xi32>
    %25 = arith.andi %23, %24 : vector<32x1xi32>
    %c1_i32 = arith.constant 1 : i32
    %26 = vector.broadcast %c1_i32 : i32 to vector<32x1xi32>
    %27 = arith.cmpi sge, %25, %26 : vector<32x1xi32>
    %c14_i32 = arith.constant 14 : i32
    %28 = vector.broadcast %c14_i32 : i32 to vector<32x1xi32>
    %29 = arith.cmpi sle, %25, %28 : vector<32x1xi32>
    %30 = arith.andi %27, %29 : vector<32x1xi1>
    %cst_17 = arith.constant 0.000000e+00 : f32
    %31 = vector.shape_cast %30 : vector<32x1xi1> to vector<32x1xi1>
    %32 = vector.broadcast %31 : vector<32x1xi1> to vector<32x112xi1>
    %33 = vector.broadcast %cst_17 : f32 to vector<32x112xf32>
    %34 = arith.select %32, %22, %33 : vector<32x112xi1>, vector<32x112xf32>
    %c0_18 = arith.constant 0 : index
    %c0_19 = arith.constant 0 : index
    %35 = vector.load %arg11[%c0_18, %c0_19] : memref<40x112xf32, #tpu.memory_space<vmem>>, vector<32x112xf32>
    tpu.vector_store %arg11[%c0_18, %c0_19], %34 {strides = array<i32>} : memref<40x112xf32, #tpu.memory_space<vmem>>, vector<32x112xf32>,
    %cst_20 = arith.constant 0.000000e+00 : f32
    %36 = vector.broadcast %cst_20 : f32 to vector<8x112xf32>
    %c32 = arith.constant 32 : index
    %c0_21 = arith.constant 0 : index
    %37 = vector.load %arg11[%c32, %c0_21] : memref<40x112xf32, #tpu.memory_space<vmem>>, vector<8x112xf32>
    tpu.vector_store %arg11[%c32, %c0_21], %36 {strides = array<i32>} : memref<40x112xf32, #tpu.memory_space<vmem>>, vector<8x112xf32>,
    %c0_22 = arith.constant 0 : index
    %c0_23 = arith.constant 0 : index
    %38 = tpu.strided_load %arg11[%c0_22, %c0_23] {strides = array<i32: 2, 1>} : memref<40x112xf32, #tpu.memory_space<vmem>>, vector<16x112xf32>
    %39 = arith.truncf %38 : vector<16x112xf32> to vector<16x112xbf16>
    %c0_24 = arith.constant 0 : index
    %c0_25 = arith.constant 0 : index
    %c0_26 = arith.constant 0 : index
    %40 = vector.load %arg2[%c0_24, %c0_25, %c0_26] : memref<3x112x112xbf16, #tpu.memory_space<vmem>>, vector<1x112x112xbf16>
    %41 = vector.shape_cast %40 : vector<1x112x112xbf16> to vector<112x112xbf16>
    %cst_27 = arith.constant dense<0.000000e+00> : vector<16x112xf32>
    %42 = tpu.matmul %39, %41, %cst_27 {dimension_numbers = #tpu.dot_dimension_numbers<[1], [0], [0], [1], [0, 0, 1, 1], [], []>} : vector<16x112xbf16>, vector<112x112xbf16>, vector<16x112xf32> -> vector<16x112xf32>
    %c1_28 = arith.constant 1 : index
    %c0_29 = arith.constant 0 : index
    %43 = tpu.strided_load %arg11[%c1_28, %c0_29] {strides = array<i32: 2, 1>} : memref<40x112xf32, #tpu.memory_space<vmem>>, vector<16x112xf32>
    %44 = arith.truncf %43 : vector<16x112xf32> to vector<16x112xbf16>
    %c1_30 = arith.constant 1 : index
    %c0_31 = arith.constant 0 : index
    %c0_32 = arith.constant 0 : index
    %45 = vector.load %arg2[%c1_30, %c0_31, %c0_32] : memref<3x112x112xbf16, #tpu.memory_space<vmem>>, vector<1x112x112xbf16>
    %46 = vector.shape_cast %45 : vector<1x112x112xbf16> to vector<112x112xbf16>
    %cst_33 = arith.constant dense<0.000000e+00> : vector<16x112xf32>
    %47 = tpu.matmul %44, %46, %cst_33 {dimension_numbers = #tpu.dot_dimension_numbers<[1], [0], [0], [1], [0, 0, 1, 1], [], []>} : vector<16x112xbf16>, vector<112x112xbf16>, vector<16x112xf32> -> vector<16x112xf32>
    %48 = arith.addf %42, %47 : vector<16x112xf32>
    %c2_34 = arith.constant 2 : index
    %c0_35 = arith.constant 0 : index
    %49 = tpu.strided_load %arg11[%c2_34, %c0_35] {strides = array<i32: 2, 1>} : memref<40x112xf32, #tpu.memory_space<vmem>>, vector<16x112xf32>
    %50 = arith.truncf %49 : vector<16x112xf32> to vector<16x112xbf16>
    %c2_36 = arith.constant 2 : index
    %c0_37 = arith.constant 0 : index
    %c0_38 = arith.constant 0 : index
    %51 = vector.load %arg2[%c2_36, %c0_37, %c0_38] : memref<3x112x112xbf16, #tpu.memory_space<vmem>>, vector<1x112x112xbf16>
    %52 = vector.shape_cast %51 : vector<1x112x112xbf16> to vector<112x112xbf16>
    %cst_39 = arith.constant dense<0.000000e+00> : vector<16x112xf32>
    %53 = tpu.matmul %50, %52, %cst_39 {dimension_numbers = #tpu.dot_dimension_numbers<[1], [0], [0], [1], [0, 0, 1, 1], [], []>} : vector<16x112xbf16>, vector<112x112xbf16>, vector<16x112xf32> -> vector<16x112xf32>
    %54 = arith.addf %48, %53 : vector<16x112xf32>
    %55 = vector.extract_strided_slice %0 {offsets = [1, 0], sizes = [1, 112], strides = [1, 1]} : vector<8x128xf32> to vector<1x112xf32>
    %56 = vector.broadcast %55 : vector<1x112xf32> to vector<16x112xf32>
    %57 = arith.addf %54, %56 : vector<16x112xf32>
    %58 = tpu.iota {dimensions = array<i32: 0>} : vector<16x1xi32>
    %c7_i32 = arith.constant 7 : i32
    %59 = vector.broadcast %c7_i32 : i32 to vector<16x1xi32>
    %60 = arith.andi %58, %59 : vector<16x1xi32>
    %c7_i32_40 = arith.constant 7 : i32
    %61 = vector.broadcast %c7_i32_40 : i32 to vector<16x1xi32>
    %62 = arith.cmpi slt, %60, %61 : vector<16x1xi32>
    %cst_41 = arith.constant 0.000000e+00 : f32
    %63 = vector.shape_cast %62 : vector<16x1xi1> to vector<16x1xi1>
    %64 = vector.broadcast %63 : vector<16x1xi1> to vector<16x112xi1>
    %65 = vector.broadcast %cst_41 : f32 to vector<16x112xf32>
    %66 = arith.select %64, %57, %65 : vector<16x112xi1>, vector<16x112xf32>
    %cst_42 = arith.constant dense<0.000000e+00> : vector<112xf32>
    %67 = vector.multi_reduction <add>, %66, %cst_42 [0] : vector<16x112xf32> to vector<112xf32>
    %68 = vector.shape_cast %67 : vector<112xf32> to vector<1x112xf32>
    %69 = arith.mulf %66, %66 : vector<16x112xf32>
    %cst_43 = arith.constant dense<0.000000e+00> : vector<112xf32>
    %70 = vector.multi_reduction <add>, %69, %cst_43 [0] : vector<16x112xf32> to vector<112xf32>
    %71 = vector.shape_cast %70 : vector<112xf32> to vector<1x112xf32>
    %c0_44 = arith.constant 0 : index
    %c0_45 = arith.constant 0 : index
    %72 = vector.load %arg6[%c0_44, %c0_45] : memref<112x112xf32, #tpu.memory_space<vmem>>, vector<112x112xf32>
    %cst_46 = arith.constant dense<0.000000e+00> : vector<1x112xf32>
    %73 = tpu.matmul %68, %72, %cst_46 {dimension_numbers = #tpu.dot_dimension_numbers<[1], [0], [0], [1], [0, 0, 1, 1], [], []>} : vector<1x112xf32>, vector<112x112xf32>, vector<1x112xf32> -> vector<1x112xf32>
    %cst_47 = arith.constant 0.0102040814 : f32
    %74 = vector.broadcast %cst_47 : f32 to vector<1x112xf32>
    %75 = arith.mulf %73, %74 : vector<1x112xf32>
    %c0_48 = arith.constant 0 : index
    %c0_49 = arith.constant 0 : index
    %76 = vector.load %arg6[%c0_48, %c0_49] : memref<112x112xf32, #tpu.memory_space<vmem>>, vector<112x112xf32>
    %cst_50 = arith.constant dense<0.000000e+00> : vector<1x112xf32>
    %77 = tpu.matmul %71, %76, %cst_50 {dimension_numbers = #tpu.dot_dimension_numbers<[1], [0], [0], [1], [0, 0, 1, 1], [], []>} : vector<1x112xf32>, vector<112x112xf32>, vector<1x112xf32> -> vector<1x112xf32>
    %cst_51 = arith.constant 0.0102040814 : f32
    %78 = vector.broadcast %cst_51 : f32 to vector<1x112xf32>
    %79 = arith.mulf %77, %78 : vector<1x112xf32>
    %80 = arith.mulf %75, %75 : vector<1x112xf32>
    %81 = arith.subf %79, %80 : vector<1x112xf32>
    %82 = vector.broadcast %75 : vector<1x112xf32> to vector<16x112xf32>
    %83 = arith.subf %57, %82 : vector<16x112xf32>
    %cst_52 = arith.constant 9.99999974E-6 : f32
    %84 = vector.broadcast %cst_52 : f32 to vector<1x112xf32>
    %85 = arith.addf %81, %84 : vector<1x112xf32>
    %86 = math.rsqrt %85 : vector<1x112xf32>
    %87 = vector.broadcast %86 : vector<1x112xf32> to vector<16x112xf32>
    %88 = arith.mulf %83, %87 : vector<16x112xf32>
    %89 = vector.extract_strided_slice %0 {offsets = [2, 0], sizes = [1, 112], strides = [1, 1]} : vector<8x128xf32> to vector<1x112xf32>
    %90 = vector.broadcast %89 : vector<1x112xf32> to vector<16x112xf32>
    %91 = arith.mulf %88, %90 : vector<16x112xf32>
    %92 = vector.extract_strided_slice %0 {offsets = [3, 0], sizes = [1, 112], strides = [1, 1]} : vector<8x128xf32> to vector<1x112xf32>
    %93 = vector.broadcast %92 : vector<1x112xf32> to vector<16x112xf32>
    %94 = arith.addf %91, %93 : vector<16x112xf32>
    %cst_53 = arith.constant 0.000000e+00 : f32
    %95 = vector.broadcast %cst_53 : f32 to vector<16x112xf32>
    %96 = arith.maximumf %94, %95 : vector<16x112xf32>
    %c0_54 = arith.constant 0 : index
    %c0_55 = arith.constant 0 : index
    %97 = vector.load %arg12[%c0_54, %c0_55] : memref<24x112xf32, #tpu.memory_space<vmem>>, vector<16x112xf32>
    tpu.vector_store %arg12[%c0_54, %c0_55], %96 {strides = array<i32>} : memref<24x112xf32, #tpu.memory_space<vmem>>, vector<16x112xf32>,
    %cst_56 = arith.constant 0.000000e+00 : f32
    %98 = vector.broadcast %cst_56 : f32 to vector<8x112xf32>
    %c16 = arith.constant 16 : index
    %c0_57 = arith.constant 0 : index
    %99 = vector.load %arg12[%c16, %c0_57] : memref<24x112xf32, #tpu.memory_space<vmem>>, vector<8x112xf32>
    tpu.vector_store %arg12[%c16, %c0_57], %98 {strides = array<i32>} : memref<24x112xf32, #tpu.memory_space<vmem>>, vector<8x112xf32>,
    %c0_58 = arith.constant 0 : index
    %c0_59 = arith.constant 0 : index
    %100 = tpu.strided_load %arg12[%c0_58, %c0_59] {strides = array<i32: 2, 1>} : memref<24x112xf32, #tpu.memory_space<vmem>>, vector<8x112xf32>
    %101 = arith.truncf %100 : vector<8x112xf32> to vector<8x112xbf16>
    %c0_60 = arith.constant 0 : index
    %c0_61 = arith.constant 0 : index
    %c0_62 = arith.constant 0 : index
    %102 = vector.load %arg3[%c0_60, %c0_61, %c0_62] : memref<3x112x96xbf16, #tpu.memory_space<vmem>>, vector<1x112x96xbf16>
    %103 = vector.shape_cast %102 : vector<1x112x96xbf16> to vector<112x96xbf16>
    %cst_63 = arith.constant dense<0.000000e+00> : vector<8x96xf32>
    %104 = tpu.matmul %101, %103, %cst_63 {dimension_numbers = #tpu.dot_dimension_numbers<[1], [0], [0], [1], [0, 0, 1, 1], [], []>} : vector<8x112xbf16>, vector<112x96xbf16>, vector<8x96xf32> -> vector<8x96xf32>
    %c1_64 = arith.constant 1 : index
    %c0_65 = arith.constant 0 : index
    %105 = tpu.strided_load %arg12[%c1_64, %c0_65] {strides = array<i32: 2, 1>} : memref<24x112xf32, #tpu.memory_space<vmem>>, vector<8x112xf32>
    %106 = arith.truncf %105 : vector<8x112xf32> to vector<8x112xbf16>
    %c1_66 = arith.constant 1 : index
    %c0_67 = arith.constant 0 : index
    %c0_68 = arith.constant 0 : index
    %107 = vector.load %arg3[%c1_66, %c0_67, %c0_68] : memref<3x112x96xbf16, #tpu.memory_space<vmem>>, vector<1x112x96xbf16>
    %108 = vector.shape_cast %107 : vector<1x112x96xbf16> to vector<112x96xbf16>
    %cst_69 = arith.constant dense<0.000000e+00> : vector<8x96xf32>
    %109 = tpu.matmul %106, %108, %cst_69 {dimension_numbers = #tpu.dot_dimension_numbers<[1], [0], [0], [1], [0, 0, 1, 1], [], []>} : vector<8x112xbf16>, vector<112x96xbf16>, vector<8x96xf32> -> vector<8x96xf32>
    %110 = arith.addf %104, %109 : vector<8x96xf32>
    %c2_70 = arith.constant 2 : index
    %c0_71 = arith.constant 0 : index
    %111 = tpu.strided_load %arg12[%c2_70, %c0_71] {strides = array<i32: 2, 1>} : memref<24x112xf32, #tpu.memory_space<vmem>>, vector<8x112xf32>
    %112 = arith.truncf %111 : vector<8x112xf32> to vector<8x112xbf16>
    %c2_72 = arith.constant 2 : index
    %c0_73 = arith.constant 0 : index
    %c0_74 = arith.constant 0 : index
    %113 = vector.load %arg3[%c2_72, %c0_73, %c0_74] : memref<3x112x96xbf16, #tpu.memory_space<vmem>>, vector<1x112x96xbf16>
    %114 = vector.shape_cast %113 : vector<1x112x96xbf16> to vector<112x96xbf16>
    %cst_75 = arith.constant dense<0.000000e+00> : vector<8x96xf32>
    %115 = tpu.matmul %112, %114, %cst_75 {dimension_numbers = #tpu.dot_dimension_numbers<[1], [0], [0], [1], [0, 0, 1, 1], [], []>} : vector<8x112xbf16>, vector<112x96xbf16>, vector<8x96xf32> -> vector<8x96xf32>
    %116 = arith.addf %110, %115 : vector<8x96xf32>
    %117 = vector.extract_strided_slice %0 {offsets = [4, 0], sizes = [1, 96], strides = [1, 1]} : vector<8x128xf32> to vector<1x96xf32>
    %118 = vector.broadcast %117 : vector<1x96xf32> to vector<8x96xf32>
    %119 = arith.addf %116, %118 : vector<8x96xf32>
    %cst_76 = arith.constant 0.000000e+00 : f32
    %120 = vector.broadcast %cst_76 : f32 to vector<8x96xf32>
    %121 = arith.maximumf %119, %120 : vector<8x96xf32>
    %c0_77 = arith.constant 0 : index
    %c0_78 = arith.constant 0 : index
    %122 = vector.load %arg13[%c0_77, %c0_78] : memref<8x96xf32, #tpu.memory_space<vmem>>, vector<8x96xf32>
    tpu.vector_store %arg13[%c0_77, %c0_78], %121 {strides = array<i32>} : memref<8x96xf32, #tpu.memory_space<vmem>>, vector<8x96xf32>,
    %c0_79 = arith.constant 0 : index
    %c0_80 = arith.constant 0 : index
    %123 = tpu.strided_load %arg13[%c0_79, %c0_80] {strides = array<i32: 4, 1>} : memref<8x96xf32, #tpu.memory_space<vmem>>, vector<2x96xf32>
    %124 = arith.truncf %123 : vector<2x96xf32> to vector<2x96xbf16>
    %c0_81 = arith.constant 0 : index
    %c0_82 = arith.constant 0 : index
    %c0_83 = arith.constant 0 : index
    %125 = vector.load %arg4[%c0_81, %c0_82, %c0_83] : memref<3x96x128xbf16, #tpu.memory_space<vmem>>, vector<1x96x128xbf16>
    %126 = vector.shape_cast %125 : vector<1x96x128xbf16> to vector<96x128xbf16>
    %cst_84 = arith.constant dense<0.000000e+00> : vector<2x128xf32>
    %127 = tpu.matmul %124, %126, %cst_84 {dimension_numbers = #tpu.dot_dimension_numbers<[1], [0], [0], [1], [0, 0, 1, 1], [], []>} : vector<2x96xbf16>, vector<96x128xbf16>, vector<2x128xf32> -> vector<2x128xf32>
    %c1_85 = arith.constant 1 : index
    %c0_86 = arith.constant 0 : index
    %128 = tpu.strided_load %arg13[%c1_85, %c0_86] {strides = array<i32: 4, 1>} : memref<8x96xf32, #tpu.memory_space<vmem>>, vector<2x96xf32>
    %129 = arith.truncf %128 : vector<2x96xf32> to vector<2x96xbf16>
    %c1_87 = arith.constant 1 : index
    %c0_88 = arith.constant 0 : index
    %c0_89 = arith.constant 0 : index
    %130 = vector.load %arg4[%c1_87, %c0_88, %c0_89] : memref<3x96x128xbf16, #tpu.memory_space<vmem>>, vector<1x96x128xbf16>
    %131 = vector.shape_cast %130 : vector<1x96x128xbf16> to vector<96x128xbf16>
    %cst_90 = arith.constant dense<0.000000e+00> : vector<2x128xf32>
    %132 = tpu.matmul %129, %131, %cst_90 {dimension_numbers = #tpu.dot_dimension_numbers<[1], [0], [0], [1], [0, 0, 1, 1], [], []>} : vector<2x96xbf16>, vector<96x128xbf16>, vector<2x128xf32> -> vector<2x128xf32>
    %133 = arith.addf %127, %132 : vector<2x128xf32>
    %c2_91 = arith.constant 2 : index
    %c0_92 = arith.constant 0 : index
    %134 = tpu.strided_load %arg13[%c2_91, %c0_92] {strides = array<i32: 4, 1>} : memref<8x96xf32, #tpu.memory_space<vmem>>, vector<2x96xf32>
    %135 = arith.truncf %134 : vector<2x96xf32> to vector<2x96xbf16>
    %c2_93 = arith.constant 2 : index
    %c0_94 = arith.constant 0 : index
    %c0_95 = arith.constant 0 : index
    %136 = vector.load %arg4[%c2_93, %c0_94, %c0_95] : memref<3x96x128xbf16, #tpu.memory_space<vmem>>, vector<1x96x128xbf16>
    %137 = vector.shape_cast %136 : vector<1x96x128xbf16> to vector<96x128xbf16>
    %cst_96 = arith.constant dense<0.000000e+00> : vector<2x128xf32>
    %138 = tpu.matmul %135, %137, %cst_96 {dimension_numbers = #tpu.dot_dimension_numbers<[1], [0], [0], [1], [0, 0, 1, 1], [], []>} : vector<2x96xbf16>, vector<96x128xbf16>, vector<2x128xf32> -> vector<2x128xf32>
    %139 = arith.addf %133, %138 : vector<2x128xf32>
    %140 = vector.extract_strided_slice %0 {offsets = [5, 0], sizes = [1, 128], strides = [1, 1]} : vector<8x128xf32> to vector<1x128xf32>
    %141 = vector.broadcast %140 : vector<1x128xf32> to vector<2x128xf32>
    %142 = arith.addf %139, %141 : vector<2x128xf32>
    %cst_97 = arith.constant 0.000000e+00 : f32
    %143 = vector.broadcast %cst_97 : f32 to vector<2x128xf32>
    %144 = arith.maximumf %142, %143 : vector<2x128xf32>
    %145 = arith.truncf %144 : vector<2x128xf32> to vector<2x128xbf16>
    %c0_98 = arith.constant 0 : index
    %c0_99 = arith.constant 0 : index
    %146 = vector.load %arg5[%c0_98, %c0_99] : memref<128x16xbf16, #tpu.memory_space<vmem>>, vector<128x16xbf16>
    %cst_100 = arith.constant dense<0.000000e+00> : vector<2x16xf32>
    %147 = tpu.matmul %145, %146, %cst_100 {dimension_numbers = #tpu.dot_dimension_numbers<[1], [0], [0], [1], [0, 0, 1, 1], [], []>} : vector<2x128xbf16>, vector<128x16xbf16>, vector<2x16xf32> -> vector<2x16xf32>
    %148 = vector.extract_strided_slice %0 {offsets = [6, 0], sizes = [1, 16], strides = [1, 1]} : vector<8x128xf32> to vector<1x16xf32>
    %149 = vector.broadcast %148 : vector<1x16xf32> to vector<2x16xf32>
    %150 = arith.addf %147, %149 : vector<2x16xf32>
    %151 = vector.extract_strided_slice %150 {offsets = [0, 0], sizes = [2, 8], strides = [1, 1]} : vector<2x16xf32> to vector<2x8xf32>
    %152 = vector.extract_strided_slice %150 {offsets = [0, 8], sizes = [2, 8], strides = [1, 1]} : vector<2x16xf32> to vector<2x8xf32>
    %153 = math.exp %152 : vector<2x8xf32>
    %c0_101 = arith.constant 0 : index
    %c0_102 = arith.constant 0 : index
    %154 = vector.load %arg8[%c0_101, %c0_102] : memref<2x8xf32, #tpu.memory_space<vmem>>, vector<2x8xf32>
    %155 = arith.mulf %153, %154 : vector<2x8xf32>
    %156 = arith.addf %151, %155 : vector<2x8xf32>
    %c0_103 = arith.constant 0 : index
    %c0_104 = arith.constant 0 : index
    %157 = vector.load %arg9[%c0_103, %c0_104] : memref<2x8xf32, #tpu.memory_space<vmem>>, vector<2x8xf32>
    tpu.vector_store %arg9[%c0_103, %c0_104], %156 {strides = array<i32>} : memref<2x8xf32, #tpu.memory_space<vmem>>, vector<2x8xf32>,
    %158 = arith.mulf %153, %153 : vector<2x8xf32>
    %159 = arith.mulf %151, %151 : vector<2x8xf32>
    %160 = arith.addf %158, %159 : vector<2x8xf32>
    %161 = arith.subf %160, %152 : vector<2x8xf32>
    %cst_105 = arith.constant 5.000000e-01 : f32
    %162 = vector.broadcast %cst_105 : f32 to vector<2x8xf32>
    %163 = arith.subf %161, %162 : vector<2x8xf32>
    %164 = vector.shape_cast %163 : vector<2x8xf32> to vector<1x2x8xf32>
    %cst_106 = arith.constant dense<0.000000e+00> : vector<1xf32>
    %165 = vector.multi_reduction <add>, %164, %cst_106 [1, 2] : vector<1x2x8xf32> to vector<1xf32>
    %166 = vector.shape_cast %165 : vector<1xf32> to vector<1x1x1xf32>
    %167 = vector.extract %166[0, 0, 0] : f32 from vector<1x1x1xf32>
    %168 = vector.broadcast %167 : f32 to vector<1x1xf32>
    %c0_107 = arith.constant 0 : index
    %c0_108 = arith.constant 0 : index
    %169 = vector.load %arg10[%c0_107, %c0_108] : memref<1x1xf32, #tpu.memory_space<vmem>>, vector<1x1xf32>
    tpu.vector_store %arg10[%c0_107, %c0_108], %168 {strides = array<i32>} : memref<1x1xf32, #tpu.memory_space<vmem>>, vector<1x1xf32>,
    return
  }
}

</mosaic_0001>

<llo_original>
// kernel: tile.33
$region0: #{tile.33}
  #allocation0 [shape = 's32[1]{0}', space=sflag, size = 0x4, scoped, tag = 'scoped memory for tile.33']
  %s0 = inlined_call_operand.vmem [shape: f32[16,16], index: 0, kind: input, shape index: {}]
  %s1 = inlined_call_operand.vmem [shape: f32[7,16,7,16], index: 1, kind: output, shape index: {}]
  // Predicated region
  $region2: #{tile.33} parent=0 // pred_check
    _
  $region3: #{tile.33} parent=0 // pred_check_branch
    %3 = sbr.rel (0) target = $region5
  $region4: #{tile.33} parent=0 // pred_region
    _
  $region5: #{tile.33} parent=0 // pred_fallthru
    _
  %v4 = vld [vmem:[%s0] ss:$0 sm:$0xff]
  %5 = vst [vmem:[%s1] sm:$0xff] %v4
  %s6 = scalar_lea.vmem %s1, 128
  %7 = vst [vmem:[%s6] sm:$0xff] %v4
  %s8 = scalar_lea.vmem %s1, 256
  %9 = vst [vmem:[%s8] sm:$0xff] %v4
  %s10 = scalar_lea.vmem %s1, 384
  %11 = vst [vmem:[%s10] sm:$0xff] %v4
  %s12 = scalar_lea.vmem %s1, 512
  %13 = vst [vmem:[%s12] sm:$0xff] %v4
  %s14 = scalar_lea.vmem %s1, 640
  %15 = vst [vmem:[%s14] sm:$0xff] %v4
  %s16 = scalar_lea.vmem %s1, 768
  %17 = vst [vmem:[%s16] sm:$0xff] %v4
  %s18 = scalar_lea.vmem %s0, 1
  %v19 = vld [vmem:[%s18] ss:$0 sm:$0xff]
  %s20 = scalar_lea.vmem %s1, 8
  %21 = vst [vmem:[%s20] sm:$0xff] %v19
  %s22 = scalar_lea.vmem %s1, 136
  %23 = vst [vmem:[%s22] sm:$0xff] %v19
  %s24 = scalar_lea.vmem %s1, 264
  %25 = vst [vmem:[%s24] sm:$0xff] %v19
  %s26 = scalar_lea.vmem %s1, 392
  %27 = vst [vmem:[%s26] sm:$0xff] %v19
  %s28 = scalar_lea.vmem %s1, 520
  %29 = vst [vmem:[%s28] sm:$0xff] %v19
  %s30 = scalar_lea.vmem %s1, 648
  %31 = vst [vmem:[%s30] sm:$0xff] %v19
  %s32 = scalar_lea.vmem %s1, 776
  %33 = vst [vmem:[%s32] sm:$0xff] %v19
  %s34 = scalar_lea.vmem %s0, 2
  %v35 = vld [vmem:[%s34] ss:$0 sm:$0xff]
  %s36 = scalar_lea.vmem %s1, 16
  %37 = vst [vmem:[%s36] sm:$0xff] %v35
  %s38 = scalar_lea.vmem %s1, 144
  %39 = vst [vmem:[%s38] sm:$0xff] %v35
  %s40 = scalar_lea.vmem %s1, 272
  %41 = vst [vmem:[%s40] sm:$0xff] %v35
  %s42 = scalar_lea.vmem %s1, 400
  %43 = vst [vmem:[%s42] sm:$0xff] %v35
  %s44 = scalar_lea.vmem %s1, 528
  %45 = vst [vmem:[%s44] sm:$0xff] %v35
  %s46 = scalar_lea.vmem %s1, 656
  %47 = vst [vmem:[%s46] sm:$0xff] %v35
  %s48 = scalar_lea.vmem %s1, 784
  %49 = vst [vmem:[%s48] sm:$0xff] %v35
  %s50 = scalar_lea.vmem %s0, 3
  %v51 = vld [vmem:[%s50] ss:$0 sm:$0xff]
  %s52 = scalar_lea.vmem %s1, 24
  %53 = vst [vmem:[%s52] sm:$0xff] %v51
  %s54 = scalar_lea.vmem %s1, 152
  %55 = vst [vmem:[%s54] sm:$0xff] %v51
  %s56 = scalar_lea.vmem %s1, 280
  %57 = vst [vmem:[%s56] sm:$0xff] %v51
  %s58 = scalar_lea.vmem %s1, 408
  %59 = vst [vmem:[%s58] sm:$0xff] %v51
  %s60 = scalar_lea.vmem %s1, 536
  %61 = vst [vmem:[%s60] sm:$0xff] %v51
  %s62 = scalar_lea.vmem %s1, 664
  %63 = vst [vmem:[%s62] sm:$0xff] %v51
  %s64 = scalar_lea.vmem %s1, 792
  %65 = vst [vmem:[%s64] sm:$0xff] %v51
  %s66 = scalar_lea.vmem %s0, 4
  %v67 = vld [vmem:[%s66] ss:$0 sm:$0xff]
  %s68 = scalar_lea.vmem %s1, 32
  %69 = vst [vmem:[%s68] sm:$0xff] %v67
  %s70 = scalar_lea.vmem %s1, 160
  %71 = vst [vmem:[%s70] sm:$0xff] %v67
  %s72 = scalar_lea.vmem %s1, 288
  %73 = vst [vmem:[%s72] sm:$0xff] %v67
  %s74 = scalar_lea.vmem %s1, 416
  %75 = vst [vmem:[%s74] sm:$0xff] %v67
  %s76 = scalar_lea.vmem %s1, 544
  %77 = vst [vmem:[%s76] sm:$0xff] %v67
  %s78 = scalar_lea.vmem %s1, 672
  %79 = vst [vmem:[%s78] sm:$0xff] %v67
  %s80 = scalar_lea.vmem %s1, 800
  %81 = vst [vmem:[%s80] sm:$0xff] %v67
  %s82 = scalar_lea.vmem %s0, 5
  %v83 = vld [vmem:[%s82] ss:$0 sm:$0xff]
  %s84 = scalar_lea.vmem %s1, 40
  %85 = vst [vmem:[%s84] sm:$0xff] %v83
  %s86 = scalar_lea.vmem %s1, 168
  %87 = vst [vmem:[%s86] sm:$0xff] %v83
  %s88 = scalar_lea.vmem %s1, 296
  %89 = vst [vmem:[%s88] sm:$0xff] %v83
  %s90 = scalar_lea.vmem %s1, 424
  %91 = vst [vmem:[%s90] sm:$0xff] %v83
  %s92 = scalar_lea.vmem %s1, 552
  %93 = vst [vmem:[%s92] sm:$0xff] %v83
  %s94 = scalar_lea.vmem %s1, 680
  %95 = vst [vmem:[%s94] sm:$0xff] %v83
  %s96 = scalar_lea.vmem %s1, 808
  %97 = vst [vmem:[%s96] sm:$0xff] %v83
  %s98 = scalar_lea.vmem %s0, 6
  %v99 = vld [vmem:[%s98] ss:$0 sm:$0xff]
  %s100 = scalar_lea.vmem %s1, 48
  %101 = vst [vmem:[%s100] sm:$0xff] %v99
  %s102 = scalar_lea.vmem %s1, 176
  %103 = vst [vmem:[%s102] sm:$0xff] %v99
  %s104 = scalar_lea.vmem %s1, 304
  %105 = vst [vmem:[%s104] sm:$0xff] %v99
  %s106 = scalar_lea.vmem %s1, 432
  %107 = vst [vmem:[%s106] sm:$0xff] %v99
  %s108 = scalar_lea.vmem %s1, 560
  %109 = vst [vmem:[%s108] sm:$0xff] %v99
  %s110 = scalar_lea.vmem %s1, 688
  %111 = vst [vmem:[%s110] sm:$0xff] %v99
  %s112 = scalar_lea.vmem %s1, 816
  %113 = vst [vmem:[%s112] sm:$0xff] %v99
  %s114 = scalar_lea.vmem %s0, 7
  %v115 = vld [vmem:[%s114] ss:$0 sm:$0xff]
  %s116 = scalar_lea.vmem %s1, 56
  %117 = vst [vmem:[%s116] sm:$0xff] %v115
  %s118 = scalar_lea.vmem %s1, 184
  %119 = vst [vmem:[%s118] sm:$0xff] %v115
  %s120 = scalar_lea.vmem %s1, 312
  %121 = vst [vmem:[%s120] sm:$0xff] %v115
  %s122 = scalar_lea.vmem %s1, 440
  %123 = vst [vmem:[%s122] sm:$0xff] %v115
  %s124 = scalar_lea.vmem %s1, 568
  %125 = vst [vmem:[%s124] sm:$0xff] %v115
  %s126 = scalar_lea.vmem %s1, 696
  %127 = vst [vmem:[%s126] sm:$0xff] %v115
  %s128 = scalar_lea.vmem %s1, 824
  %129 = vst [vmem:[%s128] sm:$0xff] %v115
  %s130 = scalar_lea.vmem %s0, 8
  %v131 = vld [vmem:[%s130] ss:$0 sm:$0xff]
  %s132 = scalar_lea.vmem %s1, 64
  %133 = vst [vmem:[%s132] sm:$0xff] %v131
  %s134 = scalar_lea.vmem %s1, 192
  %135 = vst [vmem:[%s134] sm:$0xff] %v131
  %s136 = scalar_lea.vmem %s1, 320
  %137 = vst [vmem:[%s136] sm:$0xff] %v131
  %s138 = scalar_lea.vmem %s1, 448
  %139 = vst [vmem:[%s138] sm:$0xff] %v131
  %s140 = scalar_lea.vmem %s1, 576
  %141 = vst [vmem:[%s140] sm:$0xff] %v131
  %s142 = scalar_lea.vmem %s1, 704
  %143 = vst [vmem:[%s142] sm:$0xff] %v131
  %s144 = scalar_lea.vmem %s1, 832
  %145 = vst [vmem:[%s144] sm:$0xff] %v131
  %s146 = scalar_lea.vmem %s0, 8
  %s147 = scalar_lea.vmem %s146, 1
  %v148 = vld [vmem:[%s147] ss:$0 sm:$0xff]
  %s149 = scalar_lea.vmem %s1, 72
  %150 = vst [vmem:[%s149] sm:$0xff] %v148
  %s151 = scalar_lea.vmem %s1, 200
  %152 = vst [vmem:[%s151] sm:$0xff] %v148
  %s153 = scalar_lea.vmem %s1, 328
  %154 = vst [vmem:[%s153] sm:$0xff] %v148
  %s155 = scalar_lea.vmem %s1, 456
  %156 = vst [vmem:[%s155] sm:$0xff] %v148
  %s157 = scalar_lea.vmem %s1, 584
  %158 = vst [vmem:[%s157] sm:$0xff] %v148
  %s159 = scalar_lea.vmem %s1, 712
  %160 = vst [vmem:[%s159] sm:$0xff] %v148
  %s161 = scalar_lea.vmem %s1, 840
  %162 = vst [vmem:[%s161] sm:$0xff] %v148
  %s163 = scalar_lea.vmem %s0, 8
  %s164 = scalar_lea.vmem %s163, 2
  %v165 = vld [vmem:[%s164] ss:$0 sm:$0xff]
  %s166 = scalar_lea.vmem %s1, 80
  %167 = vst [vmem:[%s166] sm:$0xff] %v165
  %s168 = scalar_lea.vmem %s1, 208
  %169 = vst [vmem:[%s168] sm:$0xff] %v165
  %s170 = scalar_lea.vmem %s1, 336
  %171 = vst [vmem:[%s170] sm:$0xff] %v165
  %s172 = scalar_lea.vmem %s1, 464
  %173 = vst [vmem:[%s172] sm:$0xff] %v165
  %s174 = scalar_lea.vmem %s1, 592
  %175 = vst [vmem:[%s174] sm:$0xff] %v165
  %s176 = scalar_lea.vmem %s1, 720
  %177 = vst [vmem:[%s176] sm:$0xff] %v165
  %s178 = scalar_lea.vmem %s1, 848
  %179 = vst [vmem:[%s178] sm:$0xff] %v165
  %s180 = scalar_lea.vmem %s0, 8
  %s181 = scalar_lea.vmem %s180, 3
  %v182 = vld [vmem:[%s181] ss:$0 sm:$0xff]
  %s183 = scalar_lea.vmem %s1, 88
  %184 = vst [vmem:[%s183] sm:$0xff] %v182
  %s185 = scalar_lea.vmem %s1, 216
  %186 = vst [vmem:[%s185] sm:$0xff] %v182
  %s187 = scalar_lea.vmem %s1, 344
  %188 = vst [vmem:[%s187] sm:$0xff] %v182
  %s189 = scalar_lea.vmem %s1, 472
  %190 = vst [vmem:[%s189] sm:$0xff] %v182
  %s191 = scalar_lea.vmem %s1, 600
  %192 = vst [vmem:[%s191] sm:$0xff] %v182
  %s193 = scalar_lea.vmem %s1, 728
  %194 = vst [vmem:[%s193] sm:$0xff] %v182
  %s195 = scalar_lea.vmem %s1, 856
  %196 = vst [vmem:[%s195] sm:$0xff] %v182
  %s197 = scalar_lea.vmem %s0, 8
  %s198 = scalar_lea.vmem %s197, 4
  %v199 = vld [vmem:[%s198] ss:$0 sm:$0xff]
  %s200 = scalar_lea.vmem %s1, 96
  %201 = vst [vmem:[%s200] sm:$0xff] %v199
  %s202 = scalar_lea.vmem %s1, 224
  %203 = vst [vmem:[%s202] sm:$0xff] %v199
  %s204 = scalar_lea.vmem %s1, 352
  %205 = vst [vmem:[%s204] sm:$0xff] %v199
  %s206 = scalar_lea.vmem %s1, 480
  %207 = vst [vmem:[%s206] sm:$0xff] %v199
  %s208 = scalar_lea.vmem %s1, 608
  %209 = vst [vmem:[%s208] sm:$0xff] %v199
  %s210 = scalar_lea.vmem %s1, 736
  %211 = vst [vmem:[%s210] sm:$0xff] %v199
  %s212 = scalar_lea.vmem %s1, 864
  %213 = vst [vmem:[%s212] sm:$0xff] %v199
  %s214 = scalar_lea.vmem %s0, 8
  %s215 = scalar_lea.vmem %s214, 5
  %v216 = vld [vmem:[%s215] ss:$0 sm:$0xff]
  %s217 = scalar_lea.vmem %s1, 104
  %218 = vst [vmem:[%s217] sm:$0xff] %v216
  %s219 = scalar_lea.vmem %s1, 232
  %220 = vst [vmem:[%s219] sm:$0xff] %v216
  %s221 = scalar_lea.vmem %s1, 360
  %222 = vst [vmem:[%s221] sm:$0xff] %v216
  %s223 = scalar_lea.vmem %s1, 488
  %224 = vst [vmem:[%s223] sm:$0xff] %v216
  %s225 = scalar_lea.vmem %s1, 616
  %226 = vst [vmem:[%s225] sm:$0xff] %v216
  %s227 = scalar_lea.vmem %s1, 744
  %228 = vst [vmem:[%s227] sm:$0xff] %v216
  %s229 = scalar_lea.vmem %s1, 872
  %230 = vst [vmem:[%s229] sm:$0xff] %v216
  %s231 = scalar_lea.vmem %s0, 8
  %s232 = scalar_lea.vmem %s231, 6
  %v233 = vld [vmem:[%s232] ss:$0 sm:$0xff]
  %s234 = scalar_lea.vmem %s1, 112
  %235 = vst [vmem:[%s234] sm:$0xff] %v233
  %s236 = scalar_lea.vmem %s1, 240
  %237 = vst [vmem:[%s236] sm:$0xff] %v233
  %s238 = scalar_lea.vmem %s1, 368
  %239 = vst [vmem:[%s238] sm:$0xff] %v233
  %s240 = scalar_lea.vmem %s1, 496
  %241 = vst [vmem:[%s240] sm:$0xff] %v233
  %s242 = scalar_lea.vmem %s1, 624
  %243 = vst [vmem:[%s242] sm:$0xff] %v233
  %s244 = scalar_lea.vmem %s1, 752
  %245 = vst [vmem:[%s244] sm:$0xff] %v233
  %s246 = scalar_lea.vmem %s1, 880
  %247 = vst [vmem:[%s246] sm:$0xff] %v233
  %s248 = scalar_lea.vmem %s0, 8
  %s249 = scalar_lea.vmem %s248, 7
  %v250 = vld [vmem:[%s249] ss:$0 sm:$0xff]
  %s251 = scalar_lea.vmem %s1, 120
  %252 = vst [vmem:[%s251] sm:$0xff] %v250
  %s253 = scalar_lea.vmem %s1, 248
  %254 = vst [vmem:[%s253] sm:$0xff] %v250
  %s255 = scalar_lea.vmem %s1, 376
  %256 = vst [vmem:[%s255] sm:$0xff] %v250
  %s257 = scalar_lea.vmem %s1, 504
  %258 = vst [vmem:[%s257] sm:$0xff] %v250
  %s259 = scalar_lea.vmem %s1, 632
  %260 = vst [vmem:[%s259] sm:$0xff] %v250
  %s261 = scalar_lea.vmem %s1, 760
  %262 = vst [vmem:[%s261] sm:$0xff] %v250
  %s263 = scalar_lea.vmem %s1, 888
  %264 = vst [vmem:[%s263] sm:$0xff] %v250

// kernel: tile.34
$region0: #{tile.34}
  %s0 = inlined_call_operand.vmem [shape: f32[7,16,7,16], index: 0, kind: input, shape index: {}]
  %s1 = inlined_call_operand.vmem [shape: f32[112,112], index: 1, kind: output, shape index: {}]
  %v2 = vld [vmem:[%s0] ss:$8 sm:$0xf]
  %v3 = vld [vmem:[%s0] ss:$8 sm:$0xf0]
  %vm4 = vcmask 1047556
  %v5 = vsel %vm4, %v3, %v2
  %vm6 = vcmask 130048
  %7 = vst.msk [vmem:[%s1] sm:$0xff] %vm6, %v5
  %s8 = scalar_lea.vmem %s0, 64
  %v9 = vld [vmem:[%s8] ss:$8 sm:$0xf]
  %s10 = scalar_lea.vmem %s0, 64
  %v11 = vld [vmem:[%s10] ss:$8 sm:$0xf0]
  %vm12 = vcmask 1047556
  %v13 = vsel %vm12, %v11, %v9
  %vm14 = vcmask 130048
  %s15 = scalar_lea.vmem %s1, 8
  %16 = vst.msk [vmem:[%s15] sm:$0xff] %vm14, %v13
  %s17 = scalar_lea.vmem %s0, 128
  %v18 = vld [vmem:[%s17] ss:$8 sm:$0xf]
  %s19 = scalar_lea.vmem %s0, 128
  %v20 = vld [vmem:[%s19] ss:$8 sm:$0xf0]
  %vm21 = vcmask 1047556
  %v22 = vsel %vm21, %v20, %v18
  %vm23 = vcmask 130048
  %s24 = scalar_lea.vmem %s1, 16
  %25 = vst.msk [vmem:[%s24] sm:$0xff] %vm23, %v22
  %s26 = scalar_lea.vmem %s0, 192
  %v27 = vld [vmem:[%s26] ss:$8 sm:$0xf]
  %s28 = scalar_lea.vmem %s0, 192
  %v29 = vld [vmem:[%s28] ss:$8 sm:$0xf0]
  %vm30 = vcmask 1047556
  %v31 = vsel %vm30, %v29, %v27
  %vm32 = vcmask 130048
  %s33 = scalar_lea.vmem %s1, 24
  %34 = vst.msk [vmem:[%s33] sm:$0xff] %vm32, %v31
  %s35 = scalar_lea.vmem %s0, 256
  %v36 = vld [vmem:[%s35] ss:$8 sm:$0xf]
  %s37 = scalar_lea.vmem %s0, 256
  %v38 = vld [vmem:[%s37] ss:$8 sm:$0xf0]
  %vm39 = vcmask 1047556
  %v40 = vsel %vm39, %v38, %v36
  %vm41 = vcmask 130048
  %s42 = scalar_lea.vmem %s1, 32
  %43 = vst.msk [vmem:[%s42] sm:$0xff] %vm41, %v40
  %s44 = scalar_lea.vmem %s0, 320
  %v45 = vld [vmem:[%s44] ss:$8 sm:$0xf]
  %s46 = scalar_lea.vmem %s0, 320
  %v47 = vld [vmem:[%s46] ss:$8 sm:$0xf0]
  %vm48 = vcmask 1047556
  %v49 = vsel %vm48, %v47, %v45
  %vm50 = vcmask 130048
  %s51 = scalar_lea.vmem %s1, 40
  %52 = vst.msk [vmem:[%s51] sm:$0xff] %vm50, %v49
  %s53 = scalar_lea.vmem %s0, 384
  %v54 = vld [vmem:[%s53] ss:$8 sm:$0xf]
  %s55 = scalar_lea.vmem %s0, 384
  %v56 = vld [vmem:[%s55] ss:$8 sm:$0xf0]
  %vm57 = vcmask 1047556
  %v58 = vsel %vm57, %v56, %v54
  %vm59 = vcmask 130048
  %s60 = scalar_lea.vmem %s1, 48
  %61 = vst.msk [vmem:[%s60] sm:$0xff] %vm59, %v58
  %s62 = scalar_lea.vmem %s0, 448
  %v63 = vld [vmem:[%s62] ss:$8 sm:$0xf]
  %s64 = scalar_lea.vmem %s0, 448
  %v65 = vld [vmem:[%s64] ss:$8 sm:$0xf0]
  %vm66 = vcmask 1047556
  %v67 = vsel %vm66, %v65, %v63
  %vm68 = vcmask 130048
  %s69 = scalar_lea.vmem %s1, 56
  %70 = vst.msk [vmem:[%s69] sm:$0xff] %vm68, %v67
  %s71 = scalar_lea.vmem %s0, 512
  %v72 = vld [vmem:[%s71] ss:$8 sm:$0xf]
  %s73 = scalar_lea.vmem %s0, 512
  %v74 = vld [vmem:[%s73] ss:$8 sm:$0xf0]
  %vm75 = vcmask 1047556
  %v76 = vsel %vm75, %v74, %v72
  %vm77 = vcmask 130048
  %s78 = scalar_lea.vmem %s1, 64
  %79 = vst.msk [vmem:[%s78] sm:$0xff] %vm77, %v76
  %s80 = scalar_lea.vmem %s0, 576
  %v81 = vld [vmem:[%s80] ss:$8 sm:$0xf]
  %s82 = scalar_lea.vmem %s0, 576
  %v83 = vld [vmem:[%s82] ss:$8 sm:$0xf0]
  %vm84 = vcmask 1047556
  %v85 = vsel %vm84, %v83, %v81
  %vm86 = vcmask 130048
  %s87 = scalar_lea.vmem %s1, 72
  %88 = vst.msk [vmem:[%s87] sm:$0xff] %vm86, %v85
  %s89 = scalar_lea.vmem %s0, 640
  %v90 = vld [vmem:[%s89] ss:$8 sm:$0xf]
  %s91 = scalar_lea.vmem %s0, 640
  %v92 = vld [vmem:[%s91] ss:$8 sm:$0xf0]
  %vm93 = vcmask 1047556
  %v94 = vsel %vm93, %v92, %v90
  %vm95 = vcmask 130048
  %s96 = scalar_lea.vmem %s1, 80
  %97 = vst.msk [vmem:[%s96] sm:$0xff] %vm95, %v94
  %s98 = scalar_lea.vmem %s0, 704
  %v99 = vld [vmem:[%s98] ss:$8 sm:$0xf]
  %s100 = scalar_lea.vmem %s0, 704
  %v101 = vld [vmem:[%s100] ss:$8 sm:$0xf0]
  %vm102 = vcmask 1047556
  %v103 = vsel %vm102, %v101, %v99
  %vm104 = vcmask 130048
  %s105 = scalar_lea.vmem %s1, 88
  %106 = vst.msk [vmem:[%s105] sm:$0xff] %vm104, %v103
  %s107 = scalar_lea.vmem %s0, 768
  %v108 = vld [vmem:[%s107] ss:$8 sm:$0xf]
  %s109 = scalar_lea.vmem %s0, 768
  %v110 = vld [vmem:[%s109] ss:$8 sm:$0xf0]
  %vm111 = vcmask 1047556
  %v112 = vsel %vm111, %v110, %v108
  %vm113 = vcmask 130048
  %s114 = scalar_lea.vmem %s1, 96
  %115 = vst.msk [vmem:[%s114] sm:$0xff] %vm113, %v112
  %s116 = scalar_lea.vmem %s0, 832
  %v117 = vld [vmem:[%s116] ss:$8 sm:$0xf]
  %s118 = scalar_lea.vmem %s0, 832
  %v119 = vld [vmem:[%s118] ss:$8 sm:$0xf0]
  %vm120 = vcmask 1047556
  %v121 = vsel %vm120, %v119, %v117
  %vm122 = vcmask 130048
  %s123 = scalar_lea.vmem %s1, 104
  %124 = vst.msk [vmem:[%s123] sm:$0xff] %vm122, %v121
  %s125 = scalar_lea.vmem %s0, 6
  %v126 = vld [vmem:[%s125] ss:$8 sm:$0xf]
  %s127 = scalar_lea.vmem %s0, 6
  %v128 = vld [vmem:[%s127] ss:$8 sm:$0xf0]
  %vm129 = vcmask 1047556
  %v130 = vsel %vm129, %v128, %v126
  %131 = vrot.lane.b32.xlu0 %v130, 96
  %v132 = vpop.permute.xlu0 %131
  %vm133 = vcmask 917248
  %134 = vst.msk [vmem:[%s1] sm:$0xff] %vm133, %v132
  %s135 = scalar_lea.vmem %s0, 262
  %v136 = vld [vmem:[%s135] ss:$8 sm:$0xf]
  %s137 = scalar_lea.vmem %s0, 262
  %v138 = vld [vmem:[%s137] ss:$8 sm:$0xf0]
  %vm139 = vcmask 1047556
  %v140 = vsel %vm139, %v138, %v136
  %141 = vrot.lane.b32.xlu0 %v140, 96
  %v142 = vpop.permute.xlu0 %141
  %vm143 = vcmask 917248
  %s144 = scalar_lea.vmem %s1, 32
  %145 = vst.msk [vmem:[%s144] sm:$0xff] %vm143, %v142
  %s146 = scalar_lea.vmem %s0, 518
  %v147 = vld [vmem:[%s146] ss:$8 sm:$0xf]
  %s148 = scalar_lea.vmem %s0, 518
  %v149 = vld [vmem:[%s148] ss:$8 sm:$0xf0]
  %vm150 = vcmask 1047556
  %v151 = vsel %vm150, %v149, %v147
  %152 = vrot.lane.b32.xlu0 %v151, 96
  %v153 = vpop.permute.xlu0 %152
  %vm154 = vcmask 917248
  %s155 = scalar_lea.vmem %s1, 64
  %156 = vst.msk [vmem:[%s155] sm:$0xff] %vm154, %v153
  %s157 = scalar_lea.vmem %s0, 774
  %v158 = vld [vmem:[%s157] ss:$8 sm:$0xf]
  %s159 = scalar_lea.vmem %s0, 774
  %v160 = vld [vmem:[%s159] ss:$8 sm:$0xf0]
  %vm161 = vcmask 1047556
  %v162 = vsel %vm161, %v160, %v158
  %163 = vrot.lane.b32.xlu0 %v162, 96
  %v164 = vpop.permute.xlu0 %163
  %vm165 = vcmask 917248
  %s166 = scalar_lea.vmem %s1, 96
  %167 = vst.msk [vmem:[%s166] sm:$0xff] %vm165, %v164
  %s168 = scalar_lea.vmem %s0, 70
  %v169 = vld [vmem:[%s168] ss:$8 sm:$0xf]
  %s170 = scalar_lea.vmem %s0, 70
  %v171 = vld [vmem:[%s170] ss:$8 sm:$0xf0]
  %vm172 = vcmask 1047556
  %v173 = vsel %vm172, %v171, %v169
  %174 = vrot.lane.b32.xlu0 %v173, 96
  %v175 = vpop.permute.xlu0 %174
  %vm176 = vcmask 917248
  %s177 = scalar_lea.vmem %s1, 8
  %178 = vst.msk [vmem:[%s177] sm:$0xff] %vm176, %v175
  %s179 = scalar_lea.vmem %s0, 326
  %v180 = vld [vmem:[%s179] ss:$8 sm:$0xf]
  %s181 = scalar_lea.vmem %s0, 326
  %v182 = vld [vmem:[%s181] ss:$8 sm:$0xf0]
  %vm183 = vcmask 1047556
  %v184 = vsel %vm183, %v182, %v180
  %185 = vrot.lane.b32.xlu0 %v184, 96
  %v186 = vpop.permute.xlu0 %185
  %vm187 = vcmask 917248
  %s188 = scalar_lea.vmem %s1, 40
  %189 = vst.msk [vmem:[%s188] sm:$0xff] %vm187, %v186
  %s190 = scalar_lea.vmem %s0, 582
  %v191 = vld [vmem:[%s190] ss:$8 sm:$0xf]
  %s192 = scalar_lea.vmem %s0, 582
  %v193 = vld [vmem:[%s192] ss:$8 sm:$0xf0]
  %vm194 = vcmask 1047556
  %v195 = vsel %vm194, %v193, %v191
  %196 = vrot.lane.b32.xlu0 %v195, 96
  %v197 = vpop.permute.xlu0 %196
  %vm198 = vcmask 917248
  %s199 = scalar_lea.vmem %s1, 72
  %200 = vst.msk [vmem:[%s199] sm:$0xff] %vm198, %v197
  %s201 = scalar_lea.vmem %s0, 838
  %v202 = vld [vmem:[%s201] ss:$8 sm:$0xf]
  %s203 = scalar_lea.vmem %s0, 838
  %v204 = vld [vmem:[%s203] ss:$8 sm:$0xf0]
  %vm205 = vcmask 1047556
  %v206 = vsel %vm205, %v204, %v202
  %207 = vrot.lane.b32.xlu0 %v206, 96
  %v208 = vpop.permute.xlu0 %207
  %vm209 = vcmask 917248
  %s210 = scalar_lea.vmem %s1, 104
  %211 = vst.msk [vmem:[%s210] sm:$0xff] %vm209, %v208
  %s212 = scalar_lea.vmem %s0, 134
  %v213 = vld [vmem:[%s212] ss:$8 sm:$0xf]
  %s214 = scalar_lea.vmem %s0, 134
  %v215 = vld [vmem:[%s214] ss:$8 sm:$0xf0]
  %vm216 = vcmask 1047556
  %v217 = vsel %vm216, %v215, %v213
  %218 = vrot.lane.b32.xlu0 %v217, 96
  %v219 = vpop.permute.xlu0 %218
  %vm220 = vcmask 917248
  %s221 = scalar_lea.vmem %s1, 16
  %222 = vst.msk [vmem:[%s221] sm:$0xff] %vm220, %v219
  %s223 = scalar_lea.vmem %s0, 390
  %v224 = vld [vmem:[%s223] ss:$8 sm:$0xf]
  %s225 = scalar_lea.vmem %s0, 390
  %v226 = vld [vmem:[%s225] ss:$8 sm:$0xf0]
  %vm227 = vcmask 1047556
  %v228 = vsel %vm227, %v226, %v224
  %229 = vrot.lane.b32.xlu0 %v228, 96
  %v230 = vpop.permute.xlu0 %229
  %vm231 = vcmask 917248
  %s232 = scalar_lea.vmem %s1, 48
  %233 = vst.msk [vmem:[%s232] sm:$0xff] %vm231, %v230
  %s234 = scalar_lea.vmem %s0, 646
  %v235 = vld [vmem:[%s234] ss:$8 sm:$0xf]
  %s236 = scalar_lea.vmem %s0, 646
  %v237 = vld [vmem:[%s236] ss:$8 sm:$0xf0]
  %vm238 = vcmask 1047556
  %v239 = vsel %vm238, %v237, %v235
  %240 = vrot.lane.b32.xlu0 %v239, 96
  %v241 = vpop.permute.xlu0 %240
  %vm242 = vcmask 917248
  %s243 = scalar_lea.vmem %s1, 80
  %244 = vst.msk [vmem:[%s243] sm:$0xff] %vm242, %v241
  %s245 = scalar_lea.vmem %s0, 198
  %v246 = vld [vmem:[%s245] ss:$8 sm:$0xf]
  %s247 = scalar_lea.vmem %s0, 198
  %v248 = vld [vmem:[%s247] ss:$8 sm:$0xf0]
  %vm249 = vcmask 1047556
  %v250 = vsel %vm249, %v248, %v246
  %251 = vrot.lane.b32.xlu0 %v250, 96
  %v252 = vpop.permute.xlu0 %251
  %vm253 = vcmask 917248
  %s254 = scalar_lea.vmem %s1, 24
  %255 = vst.msk [vmem:[%s254] sm:$0xff] %vm253, %v252
  %s256 = scalar_lea.vmem %s0, 454
  %v257 = vld [vmem:[%s256] ss:$8 sm:$0xf]
  %s258 = scalar_lea.vmem %s0, 454
  %v259 = vld [vmem:[%s258] ss:$8 sm:$0xf0]
  %vm260 = vcmask 1047556
  %v261 = vsel %vm260, %v259, %v257
  %262 = vrot.lane.b32.xlu0 %v261, 96
  %v263 = vpop.permute.xlu0 %262
  %vm264 = vcmask 917248
  %s265 = scalar_lea.vmem %s1, 56
  %266 = vst.msk [vmem:[%s265] sm:$0xff] %vm264, %v263
  %s267 = scalar_lea.vmem %s0, 710
  %v268 = vld [vmem:[%s267] ss:$8 sm:$0xf]
  %s269 = scalar_lea.vmem %s0, 710
  %v270 = vld [vmem:[%s269] ss:$8 sm:$0xf0]
  %vm271 = vcmask 1047556
  %v272 = vsel %vm271, %v270, %v268
  %273 = vrot.lane.b32.xlu0 %v272, 96
  %v274 = vpop.permute.xlu0 %273
  %vm275 = vcmask 917248
  %s276 = scalar_lea.vmem %s1, 88
  %277 = vst.msk [vmem:[%s276] sm:$0xff] %vm275, %v274
  %s278 = scalar_lea.vmem %s0, 5
  %v279 = vld [vmem:[%s278] ss:$8 sm:$0xf]
  %s280 = scalar_lea.vmem %s0, 5
  %v281 = vld [vmem:[%s280] ss:$8 sm:$0xf0]
  %vm282 = vcmask 1047556
  %v283 = vsel %vm282, %v281, %v279
  %284 = vrot.lane.b32.xlu0 %v283, 80
  %v285 = vpop.permute.xlu0 %284
  %vm286 = vcmask 786048
  %287 = vst.msk [vmem:[%s1] sm:$0xff] %vm286, %v285
  %s288 = scalar_lea.vmem %s0, 261
  %v289 = vld [vmem:[%s288] ss:$8 sm:$0xf]
  %s290 = scalar_lea.vmem %s0, 261
  %v291 = vld [vmem:[%s290] ss:$8 sm:$0xf0]
  %vm292 = vcmask 1047556
  %v293 = vsel %vm292, %v291, %v289
  %294 = vrot.lane.b32.xlu0 %v293, 80
  %v295 = vpop.permute.xlu0 %294
  %vm296 = vcmask 786048
  %s297 = scalar_lea.vmem %s1, 32
  %298 = vst.msk [vmem:[%s297] sm:$0xff] %vm296, %v295
  %s299 = scalar_lea.vmem %s0, 517
  %v300 = vld [vmem:[%s299] ss:$8 sm:$0xf]
  %s301 = scalar_lea.vmem %s0, 517
  %v302 = vld [vmem:[%s301] ss:$8 sm:$0xf0]
  %vm303 = vcmask 1047556
  %v304 = vsel %vm303, %v302, %v300
  %305 = vrot.lane.b32.xlu0 %v304, 80
  %v306 = vpop.permute.xlu0 %305
  %vm307 = vcmask 786048
  %s308 = scalar_lea.vmem %s1, 64
  %309 = vst.msk [vmem:[%s308] sm:$0xff] %vm307, %v306
  %s310 = scalar_lea.vmem %s0, 773
  %v311 = vld [vmem:[%s310] ss:$8 sm:$0xf]
  %s312 = scalar_lea.vmem %s0, 773
  %v313 = vld [vmem:[%s312] ss:$8 sm:$0xf0]
  %vm314 = vcmask 1047556
  %v315 = vsel %vm314, %v313, %v311
  %316 = vrot.lane.b32.xlu0 %v315, 80
  %v317 = vpop.permute.xlu0 %316
  %vm318 = vcmask 786048
  %s319 = scalar_lea.vmem %s1, 96
  %320 = vst.msk [vmem:[%s319] sm:$0xff] %vm318, %v317
  %s321 = scalar_lea.vmem %s0, 69
  %v322 = vld [vmem:[%s321] ss:$8 sm:$0xf]
  %s323 = scalar_lea.vmem %s0, 69
  %v324 = vld [vmem:[%s323] ss:$8 sm:$0xf0]
  %vm325 = vcmask 1047556
  %v326 = vsel %vm325, %v324, %v322
  %327 = vrot.lane.b32.xlu0 %v326, 80
  %v328 = vpop.permute.xlu0 %327
  %vm329 = vcmask 786048
  %s330 = scalar_lea.vmem %s1, 8
  %331 = vst.msk [vmem:[%s330] sm:$0xff] %vm329, %v328
  %s332 = scalar_lea.vmem %s0, 325
  %v333 = vld [vmem:[%s332] ss:$8 sm:$0xf]
  %s334 = scalar_lea.vmem %s0, 325
  %v335 = vld [vmem:[%s334] ss:$8 sm:$0xf0]
  %vm336 = vcmask 1047556
  %v337 = vsel %vm336, %v335, %v333
  %338 = vrot.lane.b32.xlu0 %v337, 80
  %v339 = vpop.permute.xlu0 %338
  %vm340 = vcmask 786048
  %s341 = scalar_lea.vmem %s1, 40
  %342 = vst.msk [vmem:[%s341] sm:$0xff] %vm340, %v339
  %s343 = scalar_lea.vmem %s0, 581
  %v344 = vld [vmem:[%s343] ss:$8 sm:$0xf]
  %s345 = scalar_lea.vmem %s0, 581
  %v346 = vld [vmem:[%s345] ss:$8 sm:$0xf0]
  %vm347 = vcmask 1047556
  %v348 = vsel %vm347, %v346, %v344
  %349 = vrot.lane.b32.xlu0 %v348, 80
  %v350 = vpop.permute.xlu0 %349
  %vm351 = vcmask 786048
  %s352 = scalar_lea.vmem %s1, 72
  %353 = vst.msk [vmem:[%s352] sm:$0xff] %vm351, %v350
  %s354 = scalar_lea.vmem %s0, 837
  %v355 = vld [vmem:[%s354] ss:$8 sm:$0xf]
  %s356 = scalar_lea.vmem %s0, 837
  %v357 = vld [vmem:[%s356] ss:$8 sm:$0xf0]
  %vm358 = vcmask 1047556
  %v359 = vsel %vm358, %v357, %v355
  %360 = vrot.lane.b32.xlu0 %v359, 80
  %v361 = vpop.permute.xlu0 %360
  %vm362 = vcmask 786048
  %s363 = scalar_lea.vmem %s1, 104
  %364 = vst.msk [vmem:[%s363] sm:$0xff] %vm362, %v361
  %s365 = scalar_lea.vmem %s0, 133
  %v366 = vld [vmem:[%s365] ss:$8 sm:$0xf]
  %s367 = scalar_lea.vmem %s0, 133
  %v368 = vld [vmem:[%s367] ss:$8 sm:$0xf0]
  %vm369 = vcmask 1047556
  %v370 = vsel %vm369, %v368, %v366
  %371 = vrot.lane.b32.xlu0 %v370, 80
  %v372 = vpop.permute.xlu0 %371
  %vm373 = vcmask 786048
  %s374 = scalar_lea.vmem %s1, 16
  %375 = vst.msk [vmem:[%s374] sm:$0xff] %vm373, %v372
  %s376 = scalar_lea.vmem %s0, 389
  %v377 = vld [vmem:[%s376] ss:$8 sm:$0xf]
  %s378 = scalar_lea.vmem %s0, 389
  %v379 = vld [vmem:[%s378] ss:$8 sm:$0xf0]
  %vm380 = vcmask 1047556
  %v381 = vsel %vm380, %v379, %v377
  %382 = vrot.lane.b32.xlu0 %v381, 80
  %v383 = vpop.permute.xlu0 %382
  %vm384 = vcmask 786048
  %s385 = scalar_lea.vmem %s1, 48
  %386 = vst.msk [vmem:[%s385] sm:$0xff] %vm384, %v383
  %s387 = scalar_lea.vmem %s0, 645
  %v388 = vld [vmem:[%s387] ss:$8 sm:$0xf]
  %s389 = scalar_lea.vmem %s0, 645
  %v390 = vld [vmem:[%s389] ss:$8 sm:$0xf0]
  %vm391 = vcmask 1047556
  %v392 = vsel %vm391, %v390, %v388
  %393 = vrot.lane.b32.xlu0 %v392, 80
  %v394 = vpop.permute.xlu0 %393
  %vm395 = vcmask 786048
  %s396 = scalar_lea.vmem %s1, 80
  %397 = vst.msk [vmem:[%s396] sm:$0xff] %vm395, %v394
  %s398 = scalar_lea.vmem %s0, 197
  %v399 = vld [vmem:[%s398] ss:$8 sm:$0xf]
  %s400 = scalar_lea.vmem %s0, 197
  %v401 = vld [vmem:[%s400] ss:$8 sm:$0xf0]
  %vm402 = vcmask 1047556
  %v403 = vsel %vm402, %v401, %v399
  %404 = vrot.lane.b32.xlu0 %v403, 80
  %v405 = vpop.permute.xlu0 %404
  %vm406 = vcmask 786048
  %s407 = scalar_lea.vmem %s1, 24
  %408 = vst.msk [vmem:[%s407] sm:$0xff] %vm406, %v405
  %s409 = scalar_lea.vmem %s0, 453
  %v410 = vld [vmem:[%s409] ss:$8 sm:$0xf]
  %s411 = scalar_lea.vmem %s0, 453
  %v412 = vld [vmem:[%s411] ss:$8 sm:$0xf0]
  %vm413 = vcmask 1047556
  %v414 = vsel %vm413, %v412, %v410
  %415 = vrot.lane.b32.xlu0 %v414, 80
  %v416 = vpop.permute.xlu0 %415
  %vm417 = vcmask 786048
  %s418 = scalar_lea.vmem %s1, 56
  %419 = vst.msk [vmem:[%s418] sm:$0xff] %vm417, %v416
  %s420 = scalar_lea.vmem %s0, 709
  %v421 = vld [vmem:[%s420] ss:$8 sm:$0xf]
  %s422 = scalar_lea.vmem %s0, 709
  %v423 = vld [vmem:[%s422] ss:$8 sm:$0xf0]
  %vm424 = vcmask 1047556
  %v425 = vsel %vm424, %v423, %v421
  %426 = vrot.lane.b32.xlu0 %v425, 80
  %v427 = vpop.permute.xlu0 %426
  %vm428 = vcmask 786048
  %s429 = scalar_lea.vmem %s1, 88
  %430 = vst.msk [vmem:[%s429] sm:$0xff] %vm428, %v427
  %s431 = scalar_lea.vmem %s0, 4
  %v432 = vld [vmem:[%s431] ss:$8 sm:$0xf]
  %s433 = scalar_lea.vmem %s0, 4
  %v434 = vld [vmem:[%s433] ss:$8 sm:$0xf0]
  %vm435 = vcmask 1047556
  %v436 = vsel %vm435, %v434, %v432
  %437 = vrot.lane.b32.xlu0 %v436, 64
  %v438 = vpop.permute.xlu0 %437
  %vm439 = vcmask 654848
  %440 = vst.msk [vmem:[%s1] sm:$0xff] %vm439, %v438
  %s441 = scalar_lea.vmem %s0, 260
  %v442 = vld [vmem:[%s441] ss:$8 sm:$0xf]
  %s443 = scalar_lea.vmem %s0, 260
  %v444 = vld [vmem:[%s443] ss:$8 sm:$0xf0]
  %vm445 = vcmask 1047556
  %v446 = vsel %vm445, %v444, %v442
  %447 = vrot.lane.b32.xlu0 %v446, 64
  %v448 = vpop.permute.xlu0 %447
  %vm449 = vcmask 654848
  %s450 = scalar_lea.vmem %s1, 32
  %451 = vst.msk [vmem:[%s450] sm:$0xff] %vm449, %v448
  %s452 = scalar_lea.vmem %s0, 516
  %v453 = vld [vmem:[%s452] ss:$8 sm:$0xf]
  %s454 = scalar_lea.vmem %s0, 516
  %v455 = vld [vmem:[%s454] ss:$8 sm:$0xf0]
  %vm456 = vcmask 1047556
  %v457 = vsel %vm456, %v455, %v453
  %458 = vrot.lane.b32.xlu0 %v457, 64
  %v459 = vpop.permute.xlu0 %458
  %vm460 = vcmask 654848
  %s461 = scalar_lea.vmem %s1, 64
  %462 = vst.msk [vmem:[%s461] sm:$0xff] %vm460, %v459
  %s463 = scalar_lea.vmem %s0, 772
  %v464 = vld [vmem:[%s463] ss:$8 sm:$0xf]
  %s465 = scalar_lea.vmem %s0, 772
  %v466 = vld [vmem:[%s465] ss:$8 sm:$0xf0]
  %vm467 = vcmask 1047556
  %v468 = vsel %vm467, %v466, %v464
  %469 = vrot.lane.b32.xlu0 %v468, 64
  %v470 = vpop.permute.xlu0 %469
  %vm471 = vcmask 654848
  %s472 = scalar_lea.vmem %s1, 96
  %473 = vst.msk [vmem:[%s472] sm:$0xff] %vm471, %v470
  %s474 = scalar_lea.vmem %s0, 68
  %v475 = vld [vmem:[%s474] ss:$8 sm:$0xf]
  %s476 = scalar_lea.vmem %s0, 68
  %v477 = vld [vmem:[%s476] ss:$8 sm:$0xf0]
  %vm478 = vcmask 1047556
  %v479 = vsel %vm478, %v477, %v475
  %480 = vrot.lane.b32.xlu0 %v479, 64
  %v481 = vpop.permute.xlu0 %480
  %vm482 = vcmask 654848
  %s483 = scalar_lea.vmem %s1, 8
  %484 = vst.msk [vmem:[%s483] sm:$0xff] %vm482, %v481
  %s485 = scalar_lea.vmem %s0, 324
  %v486 = vld [vmem:[%s485] ss:$8 sm:$0xf]
  %s487 = scalar_lea.vmem %s0, 324
  %v488 = vld [vmem:[%s487] ss:$8 sm:$0xf0]
  %vm489 = vcmask 1047556
  %v490 = vsel %vm489, %v488, %v486
  %491 = vrot.lane.b32.xlu0 %v490, 64
  %v492 = vpop.permute.xlu0 %491
  %vm493 = vcmask 654848
  %s494 = scalar_lea.vmem %s1, 40
  %495 = vst.msk [vmem:[%s494] sm:$0xff] %vm493, %v492
  %s496 = scalar_lea.vmem %s0, 580
  %v497 = vld [vmem:[%s496] ss:$8 sm:$0xf]
  %s498 = scalar_lea.vmem %s0, 580
  %v499 = vld [vmem:[%s498] ss:$8 sm:$0xf0]
  %vm500 = vcmask 1047556
  %v501 = vsel %vm500, %v499, %v497
  %502 = vrot.lane.b32.xlu0 %v501, 64
  %v503 = vpop.permute.xlu0 %502
  %vm504 = vcmask 654848
  %s505 = scalar_lea.vmem %s1, 72
  %506 = vst.msk [vmem:[%s505] sm:$0xff] %vm504, %v503
  %s507 = scalar_lea.vmem %s0, 836
  %v508 = vld [vmem:[%s507] ss:$8 sm:$0xf]
  %s509 = scalar_lea.vmem %s0, 836
  %v510 = vld [vmem:[%s509] ss:$8 sm:$0xf0]
  %vm511 = vcmask 1047556
  %v512 = vsel %vm511, %v510, %v508
  %513 = vrot.lane.b32.xlu0 %v512, 64
  %v514 = vpop.permute.xlu0 %513
  %vm515 = vcmask 654848
  %s516 = scalar_lea.vmem %s1, 104
  %517 = vst.msk [vmem:[%s516] sm:$0xff] %vm515, %v514
  %s518 = scalar_lea.vmem %s0, 132
  %v519 = vld [vmem:[%s518] ss:$8 sm:$0xf]
  %s520 = scalar_lea.vmem %s0, 132
  %v521 = vld [vmem:[%s520] ss:$8 sm:$0xf0]
  %vm522 = vcmask 1047556
  %v523 = vsel %vm522, %v521, %v519
  %524 = vrot.lane.b32.xlu0 %v523, 64
  %v525 = vpop.permute.xlu0 %524
  %vm526 = vcmask 654848
  %s527 = scalar_lea.vmem %s1, 16
  %528 = vst.msk [vmem:[%s527] sm:$0xff] %vm526, %v525
  %s529 = scalar_lea.vmem %s0, 388
  %v530 = vld [vmem:[%s529] ss:$8 sm:$0xf]
  %s531 = scalar_lea.vmem %s0, 388
  %v532 = vld [vmem:[%s531] ss:$8 sm:$0xf0]
  %vm533 = vcmask 1047556
  %v534 = vsel %vm533, %v532, %v530
  %535 = vrot.lane.b32.xlu0 %v534, 64
  %v536 = vpop.permute.xlu0 %535
  %vm537 = vcmask 654848
  %s538 = scalar_lea.vmem %s1, 48
  %539 = vst.msk [vmem:[%s538] sm:$0xff] %vm537, %v536
  %s540 = scalar_lea.vmem %s0, 644
  %v541 = vld [vmem:[%s540] ss:$8 sm:$0xf]
  %s542 = scalar_lea.vmem %s0, 644
  %v543 = vld [vmem:[%s542] ss:$8 sm:$0xf0]
  %vm544 = vcmask 1047556
  %v545 = vsel %vm544, %v543, %v541
  %546 = vrot.lane.b32.xlu0 %v545, 64
  %v547 = vpop.permute.xlu0 %546
  %vm548 = vcmask 654848
  %s549 = scalar_lea.vmem %s1, 80
  %550 = vst.msk [vmem:[%s549] sm:$0xff] %vm548, %v547
  %s551 = scalar_lea.vmem %s0, 196
  %v552 = vld [vmem:[%s551] ss:$8 sm:$0xf]
  %s553 = scalar_lea.vmem %s0, 196
  %v554 = vld [vmem:[%s553] ss:$8 sm:$0xf0]
  %vm555 = vcmask 1047556
  %v556 = vsel %vm555, %v554, %v552
  %557 = vrot.lane.b32.xlu0 %v556, 64
  %v558 = vpop.permute.xlu0 %557
  %vm559 = vcmask 654848
  %s560 = scalar_lea.vmem %s1, 24
  %561 = vst.msk [vmem:[%s560] sm:$0xff] %vm559, %v558
  %s562 = scalar_lea.vmem %s0, 452
  %v563 = vld [vmem:[%s562] ss:$8 sm:$0xf]
  %s564 = scalar_lea.vmem %s0, 452
  %v565 = vld [vmem:[%s564] ss:$8 sm:$0xf0]
  %vm566 = vcmask 1047556
  %v567 = vsel %vm566, %v565, %v563
  %568 = vrot.lane.b32.xlu0 %v567, 64
  %v569 = vpop.permute.xlu0 %568
  %vm570 = vcmask 654848
  %s571 = scalar_lea.vmem %s1, 56
  %572 = vst.msk [vmem:[%s571] sm:$0xff] %vm570, %v569
  %s573 = scalar_lea.vmem %s0, 708
  %v574 = vld [vmem:[%s573] ss:$8 sm:$0xf]
  %s575 = scalar_lea.vmem %s0, 708
  %v576 = vld [vmem:[%s575] ss:$8 sm:$0xf0]
  %vm577 = vcmask 1047556
  %v578 = vsel %vm577, %v576, %v574
  %579 = vrot.lane.b32.xlu0 %v578, 64
  %v580 = vpop.permute.xlu0 %579
  %vm581 = vcmask 654848
  %s582 = scalar_lea.vmem %s1, 88
  %583 = vst.msk [vmem:[%s582] sm:$0xff] %vm581, %v580
  %s584 = scalar_lea.vmem %s0, 3
  %v585 = vld [vmem:[%s584] ss:$8 sm:$0xf]
  %s586 = scalar_lea.vmem %s0, 3
  %v587 = vld [vmem:[%s586] ss:$8 sm:$0xf0]
  %vm588 = vcmask 1047556
  %v589 = vsel %vm588, %v587, %v585
  %590 = vrot.lane.b32.xlu0 %v589, 48
  %v591 = vpop.permute.xlu0 %590
  %vm592 = vcmask 523648
  %593 = vst.msk [vmem:[%s1] sm:$0xff] %vm592, %v591
  %s594 = scalar_lea.vmem %s0, 259
  %v595 = vld [vmem:[%s594] ss:$8 sm:$0xf]
  %s596 = scalar_lea.vmem %s0, 259
  %v597 = vld [vmem:[%s596] ss:$8 sm:$0xf0]
  %vm598 = vcmask 1047556
  %v599 = vsel %vm598, %v597, %v595
  %600 = vrot.lane.b32.xlu0 %v599, 48
  %v601 = vpop.permute.xlu0 %600
  %vm602 = vcmask 523648
  %s603 = scalar_lea.vmem %s1, 32
  %604 = vst.msk [vmem:[%s603] sm:$0xff] %vm602, %v601
  %s605 = scalar_lea.vmem %s0, 515
  %v606 = vld [vmem:[%s605] ss:$8 sm:$0xf]
  %s607 = scalar_lea.vmem %s0, 515
  %v608 = vld [vmem:[%s607] ss:$8 sm:$0xf0]
  %vm609 = vcmask 1047556
  %v610 = vsel %vm609, %v608, %v606
  %611 = vrot.lane.b32.xlu0 %v610, 48
  %v612 = vpop.permute.xlu0 %611
  %vm613 = vcmask 523648
  %s614 = scalar_lea.vmem %s1, 64
  %615 = vst.msk [vmem:[%s614] sm:$0xff] %vm613, %v612
  %s616 = scalar_lea.vmem %s0, 771
  %v617 = vld [vmem:[%s616] ss:$8 sm:$0xf]
  %s618 = scalar_lea.vmem %s0, 771
  %v619 = vld [vmem:[%s618] ss:$8 sm:$0xf0]
  %vm620 = vcmask 1047556
  %v621 = vsel %vm620, %v619, %v617
  %622 = vrot.lane.b32.xlu0 %v621, 48
  %v623 = vpop.permute.xlu0 %622
  %vm624 = vcmask 523648
  %s625 = scalar_lea.vmem %s1, 96
  %626 = vst.msk [vmem:[%s625] sm:$0xff] %vm624, %v623
  %s627 = scalar_lea.vmem %s0, 67
  %v628 = vld [vmem:[%s627] ss:$8 sm:$0xf]
  %s629 = scalar_lea.vmem %s0, 67
  %v630 = vld [vmem:[%s629] ss:$8 sm:$0xf0]
  %vm631 = vcmask 1047556
  %v632 = vsel %vm631, %v630, %v628
  %633 = vrot.lane.b32.xlu0 %v632, 48
  %v634 = vpop.permute.xlu0 %633
  %vm635 = vcmask 523648
  %s636 = scalar_lea.vmem %s1, 8
  %637 = vst.msk [vmem:[%s636] sm:$0xff] %vm635, %v634
  %s638 = scalar_lea.vmem %s0, 323
  %v639 = vld [vmem:[%s638] ss:$8 sm:$0xf]
  %s640 = scalar_lea.vmem %s0, 323
  %v641 = vld [vmem:[%s640] ss:$8 sm:$0xf0]
  %vm642 = vcmask 1047556
  %v643 = vsel %vm642, %v641, %v639
  %644 = vrot.lane.b32.xlu0 %v643, 48
  %v645 = vpop.permute.xlu0 %644
  %vm646 = vcmask 523648
  %s647 = scalar_lea.vmem %s1, 40
  %648 = vst.msk [vmem:[%s647] sm:$0xff] %vm646, %v645
  %s649 = scalar_lea.vmem %s0, 579
  %v650 = vld [vmem:[%s649] ss:$8 sm:$0xf]
  %s651 = scalar_lea.vmem %s0, 579
  %v652 = vld [vmem:[%s651] ss:$8 sm:$0xf0]
  %vm653 = vcmask 1047556
  %v654 = vsel %vm653, %v652, %v650
  %655 = vrot.lane.b32.xlu0 %v654, 48
  %v656 = vpop.permute.xlu0 %655
  %vm657 = vcmask 523648
  %s658 = scalar_lea.vmem %s1, 72
  %659 = vst.msk [vmem:[%s658] sm:$0xff] %vm657, %v656
  %s660 = scalar_lea.vmem %s0, 835
  %v661 = vld [vmem:[%s660] ss:$8 sm:$0xf]
  %s662 = scalar_lea.vmem %s0, 835
  %v663 = vld [vmem:[%s662] ss:$8 sm:$0xf0]
  %vm664 = vcmask 1047556
  %v665 = vsel %vm664, %v663, %v661
  %666 = vrot.lane.b32.xlu0 %v665, 48
  %v667 = vpop.permute.xlu0 %666
  %vm668 = vcmask 523648
  %s669 = scalar_lea.vmem %s1, 104
  %670 = vst.msk [vmem:[%s669] sm:$0xff] %vm668, %v667
  %s671 = scalar_lea.vmem %s0, 131
  %v672 = vld [vmem:[%s671] ss:$8 sm:$0xf]
  %s673 = scalar_lea.vmem %s0, 131
  %v674 = vld [vmem:[%s673] ss:$8 sm:$0xf0]
  %vm675 = vcmask 1047556
  %v676 = vsel %vm675, %v674, %v672
  %677 = vrot.lane.b32.xlu0 %v676, 48
  %v678 = vpop.permute.xlu0 %677
  %vm679 = vcmask 523648
  %s680 = scalar_lea.vmem %s1, 16
  %681 = vst.msk [vmem:[%s680] sm:$0xff] %vm679, %v678
  %s682 = scalar_lea.vmem %s0, 387
  %v683 = vld [vmem:[%s682] ss:$8 sm:$0xf]
  %s684 = scalar_lea.vmem %s0, 387
  %v685 = vld [vmem:[%s684] ss:$8 sm:$0xf0]
  %vm686 = vcmask 1047556
  %v687 = vsel %vm686, %v685, %v683
  %688 = vrot.lane.b32.xlu0 %v687, 48
  %v689 = vpop.permute.xlu0 %688
  %vm690 = vcmask 523648
  %s691 = scalar_lea.vmem %s1, 48
  %692 = vst.msk [vmem:[%s691] sm:$0xff] %vm690, %v689
  %s693 = scalar_lea.vmem %s0, 643
  %v694 = vld [vmem:[%s693] ss:$8 sm:$0xf]
  %s695 = scalar_lea.vmem %s0, 643
  %v696 = vld [vmem:[%s695] ss:$8 sm:$0xf0]
  %vm697 = vcmask 1047556
  %v698 = vsel %vm697, %v696, %v694
  %699 = vrot.lane.b32.xlu0 %v698, 48
  %v700 = vpop.permute.xlu0 %699
  %vm701 = vcmask 523648
  %s702 = scalar_lea.vmem %s1, 80
  %703 = vst.msk [vmem:[%s702] sm:$0xff] %vm701, %v700
  %s704 = scalar_lea.vmem %s0, 195
  %v705 = vld [vmem:[%s704] ss:$8 sm:$0xf]
  %s706 = scalar_lea.vmem %s0, 195
  %v707 = vld [vmem:[%s706] ss:$8 sm:$0xf0]
  %vm708 = vcmask 1047556
  %v709 = vsel %vm708, %v707, %v705
  %710 = vrot.lane.b32.xlu0 %v709, 48
  %v711 = vpop.permute.xlu0 %710
  %vm712 = vcmask 523648
  %s713 = scalar_lea.vmem %s1, 24
  %714 = vst.msk [vmem:[%s713] sm:$0xff] %vm712, %v711
  %s715 = scalar_lea.vmem %s0, 451
  %v716 = vld [vmem:[%s715] ss:$8 sm:$0xf]
  %s717 = scalar_lea.vmem %s0, 451
  %v718 = vld [vmem:[%s717] ss:$8 sm:$0xf0]
  %vm719 = vcmask 1047556
  %v720 = vsel %vm719, %v718, %v716
  %721 = vrot.lane.b32.xlu0 %v720, 48
  %v722 = vpop.permute.xlu0 %721
  %vm723 = vcmask 523648
  %s724 = scalar_lea.vmem %s1, 56
  %725 = vst.msk [vmem:[%s724] sm:$0xff] %vm723, %v722
  %s726 = scalar_lea.vmem %s0, 707
  %v727 = vld [vmem:[%s726] ss:$8 sm:$0xf]
  %s728 = scalar_lea.vmem %s0, 707
  %v729 = vld [vmem:[%s728] ss:$8 sm:$0xf0]
  %vm730 = vcmask 1047556
  %v731 = vsel %vm730, %v729, %v727
  %732 = vrot.lane.b32.xlu0 %v731, 48
  %v733 = vpop.permute.xlu0 %732
  %vm734 = vcmask 523648
  %s735 = scalar_lea.vmem %s1, 88
  %736 = vst.msk [vmem:[%s735] sm:$0xff] %vm734, %v733
  %s737 = scalar_lea.vmem %s0, 2
  %v738 = vld [vmem:[%s737] ss:$8 sm:$0xf]
  %s739 = scalar_lea.vmem %s0, 2
  %v740 = vld [vmem:[%s739] ss:$8 sm:$0xf0]
  %vm741 = vcmask 1047556
  %v742 = vsel %vm741, %v740, %v738
  %743 = vrot.lane.b32.xlu0 %v742, 32
  %v744 = vpop.permute.xlu0 %743
  %vm745 = vcmask 392448
  %746 = vst.msk [vmem:[%s1] sm:$0xff] %vm745, %v744
  %s747 = scalar_lea.vmem %s0, 258
  %v748 = vld [vmem:[%s747] ss:$8 sm:$0xf]
  %s749 = scalar_lea.vmem %s0, 258
  %v750 = vld [vmem:[%s749] ss:$8 sm:$0xf0]
  %vm751 = vcmask 1047556
  %v752 = vsel %vm751, %v750, %v748
  %753 = vrot.lane.b32.xlu0 %v752, 32
  %v754 = vpop.permute.xlu0 %753
  %vm755 = vcmask 392448
  %s756 = scalar_lea.vmem %s1, 32
  %757 = vst.msk [vmem:[%s756] sm:$0xff] %vm755, %v754
  %s758 = scalar_lea.vmem %s0, 514
  %v759 = vld [vmem:[%s758] ss:$8 sm:$0xf]
  %s760 = scalar_lea.vmem %s0, 514
  %v761 = vld [vmem:[%s760] ss:$8 sm:$0xf0]
  %vm762 = vcmask 1047556
  %v763 = vsel %vm762, %v761, %v759
  %764 = vrot.lane.b32.xlu0 %v763, 32
  %v765 = vpop.permute.xlu0 %764
  %vm766 = vcmask 392448
  %s767 = scalar_lea.vmem %s1, 64
  %768 = vst.msk [vmem:[%s767] sm:$0xff] %vm766, %v765
  %s769 = scalar_lea.vmem %s0, 770
  %v770 = vld [vmem:[%s769] ss:$8 sm:$0xf]
  %s771 = scalar_lea.vmem %s0, 770
  %v772 = vld [vmem:[%s771] ss:$8 sm:$0xf0]
  %vm773 = vcmask 1047556
  %v774 = vsel %vm773, %v772, %v770
  %775 = vrot.lane.b32.xlu0 %v774, 32
  %v776 = vpop.permute.xlu0 %775
  %vm777 = vcmask 392448
  %s778 = scalar_lea.vmem %s1, 96
  %779 = vst.msk [vmem:[%s778] sm:$0xff] %vm777, %v776
  %s780 = scalar_lea.vmem %s0, 66
  %v781 = vld [vmem:[%s780] ss:$8 sm:$0xf]
  %s782 = scalar_lea.vmem %s0, 66
  %v783 = vld [vmem:[%s782] ss:$8 sm:$0xf0]
  %vm784 = vcmask 1047556
  %v785 = vsel %vm784, %v783, %v781
  %786 = vrot.lane.b32.xlu0 %v785, 32
  %v787 = vpop.permute.xlu0 %786
  %vm788 = vcmask 392448
  %s789 = scalar_lea.vmem %s1, 8
  %790 = vst.msk [vmem:[%s789] sm:$0xff] %vm788, %v787
  %s791 = scalar_lea.vmem %s0, 322
  %v792 = vld [vmem:[%s791] ss:$8 sm:$0xf]
  %s793 = scalar_lea.vmem %s0, 322
  %v794 = vld [vmem:[%s793] ss:$8 sm:$0xf0]
  %vm795 = vcmask 1047556
  %v796 = vsel %vm795, %v794, %v792
  %797 = vrot.lane.b32.xlu0 %v796, 32
  %v798 = vpop.permute.xlu0 %797
  %vm799 = vcmask 392448
  %s800 = scalar_lea.vmem %s1, 40
  %801 = vst.msk [vmem:[%s800] sm:$0xff] %vm799, %v798
  %s802 = scalar_lea.vmem %s0, 578
  %v803 = vld [vmem:[%s802] ss:$8 sm:$0xf]
  %s804 = scalar_lea.vmem %s0, 578
  %v805 = vld [vmem:[%s804] ss:$8 sm:$0xf0]
  %vm806 = vcmask 1047556
  %v807 = vsel %vm806, %v805, %v803
  %808 = vrot.lane.b32.xlu0 %v807, 32
  %v809 = vpop.permute.xlu0 %808
  %vm810 = vcmask 392448
  %s811 = scalar_lea.vmem %s1, 72
  %812 = vst.msk [vmem:[%s811] sm:$0xff] %vm810, %v809
  %s813 = scalar_lea.vmem %s0, 834
  %v814 = vld [vmem:[%s813] ss:$8 sm:$0xf]
  %s815 = scalar_lea.vmem %s0, 834
  %v816 = vld [vmem:[%s815] ss:$8 sm:$0xf0]
  %vm817 = vcmask 1047556
  %v818 = vsel %vm817, %v816, %v814
  %819 = vrot.lane.b32.xlu0 %v818, 32
  %v820 = vpop.permute.xlu0 %819
  %vm821 = vcmask 392448
  %s822 = scalar_lea.vmem %s1, 104
  %823 = vst.msk [vmem:[%s822] sm:$0xff] %vm821, %v820
  %s824 = scalar_lea.vmem %s0, 130
  %v825 = vld [vmem:[%s824] ss:$8 sm:$0xf]
  %s826 = scalar_lea.vmem %s0, 130
  %v827 = vld [vmem:[%s826] ss:$8 sm:$0xf0]
  %vm828 = vcmask 1047556
  %v829 = vsel %vm828, %v827, %v825
  %830 = vrot.lane.b32.xlu0 %v829, 32
  %v831 = vpop.permute.xlu0 %830
  %vm832 = vcmask 392448
  %s833 = scalar_lea.vmem %s1, 16
  %834 = vst.msk [vmem:[%s833] sm:$0xff] %vm832, %v831
  %s835 = scalar_lea.vmem %s0, 386
  %v836 = vld [vmem:[%s835] ss:$8 sm:$0xf]
  %s837 = scalar_lea.vmem %s0, 386
  %v838 = vld [vmem:[%s837] ss:$8 sm:$0xf0]
  %vm839 = vcmask 1047556
  %v840 = vsel %vm839, %v838, %v836
  %841 = vrot.lane.b32.xlu0 %v840, 32
  %v842 = vpop.permute.xlu0 %841
  %vm843 = vcmask 392448
  %s844 = scalar_lea.vmem %s1, 48
  %845 = vst.msk [vmem:[%s844] sm:$0xff] %vm843, %v842
  %s846 = scalar_lea.vmem %s0, 642
  %v847 = vld [vmem:[%s846] ss:$8 sm:$0xf]
  %s848 = scalar_lea.vmem %s0, 642
  %v849 = vld [vmem:[%s848] ss:$8 sm:$0xf0]
  %vm850 = vcmask 1047556
  %v851 = vsel %vm850, %v849, %v847
  %852 = vrot.lane.b32.xlu0 %v851, 32
  %v853 = vpop.permute.xlu0 %852
  %vm854 = vcmask 392448
  %s855 = scalar_lea.vmem %s1, 80
  %856 = vst.msk [vmem:[%s855] sm:$0xff] %vm854, %v853
  %s857 = scalar_lea.vmem %s0, 194
  %v858 = vld [vmem:[%s857] ss:$8 sm:$0xf]
  %s859 = scalar_lea.vmem %s0, 194
  %v860 = vld [vmem:[%s859] ss:$8 sm:$0xf0]
  %vm861 = vcmask 1047556
  %v862 = vsel %vm861, %v860, %v858
  %863 = vrot.lane.b32.xlu0 %v862, 32
  %v864 = vpop.permute.xlu0 %863
  %vm865 = vcmask 392448
  %s866 = scalar_lea.vmem %s1, 24
  %867 = vst.msk [vmem:[%s866] sm:$0xff] %vm865, %v864
  %s868 = scalar_lea.vmem %s0, 450
  %v869 = vld [vmem:[%s868] ss:$8 sm:$0xf]
  %s870 = scalar_lea.vmem %s0, 450
  %v871 = vld [vmem:[%s870] ss:$8 sm:$0xf0]
  %vm872 = vcmask 1047556
  %v873 = vsel %vm872, %v871, %v869
  %874 = vrot.lane.b32.xlu0 %v873, 32
  %v875 = vpop.permute.xlu0 %874
  %vm876 = vcmask 392448
  %s877 = scalar_lea.vmem %s1, 56
  %878 = vst.msk [vmem:[%s877] sm:$0xff] %vm876, %v875
  %s879 = scalar_lea.vmem %s0, 706
  %v880 = vld [vmem:[%s879] ss:$8 sm:$0xf]
  %s881 = scalar_lea.vmem %s0, 706
  %v882 = vld [vmem:[%s881] ss:$8 sm:$0xf0]
  %vm883 = vcmask 1047556
  %v884 = vsel %vm883, %v882, %v880
  %885 = vrot.lane.b32.xlu0 %v884, 32
  %v886 = vpop.permute.xlu0 %885
  %vm887 = vcmask 392448
  %s888 = scalar_lea.vmem %s1, 88
  %889 = vst.msk [vmem:[%s888] sm:$0xff] %vm887, %v886
  %s890 = scalar_lea.vmem %s0, 1
  %v891 = vld [vmem:[%s890] ss:$8 sm:$0xf]
  %s892 = scalar_lea.vmem %s0, 1
  %v893 = vld [vmem:[%s892] ss:$8 sm:$0xf0]
  %vm894 = vcmask 1047556
  %v895 = vsel %vm894, %v893, %v891
  %896 = vrot.lane.b32.xlu0 %v895, 16
  %v897 = vpop.permute.xlu0 %896
  %vm898 = vcmask 261248
  %899 = vst.msk [vmem:[%s1] sm:$0xff] %vm898, %v897
  %s900 = scalar_lea.vmem %s0, 257
  %v901 = vld [vmem:[%s900] ss:$8 sm:$0xf]
  %s902 = scalar_lea.vmem %s0, 257
  %v903 = vld [vmem:[%s902] ss:$8 sm:$0xf0]
  %vm904 = vcmask 1047556
  %v905 = vsel %vm904, %v903, %v901
  %906 = vrot.lane.b32.xlu0 %v905, 16
  %v907 = vpop.permute.xlu0 %906
  %vm908 = vcmask 261248
  %s909 = scalar_lea.vmem %s1, 32
  %910 = vst.msk [vmem:[%s909] sm:$0xff] %vm908, %v907
  %s911 = scalar_lea.vmem %s0, 513
  %v912 = vld [vmem:[%s911] ss:$8 sm:$0xf]
  %s913 = scalar_lea.vmem %s0, 513
  %v914 = vld [vmem:[%s913] ss:$8 sm:$0xf0]
  %vm915 = vcmask 1047556
  %v916 = vsel %vm915, %v914, %v912
  %917 = vrot.lane.b32.xlu0 %v916, 16
  %v918 = vpop.permute.xlu0 %917
  %vm919 = vcmask 261248
  %s920 = scalar_lea.vmem %s1, 64
  %921 = vst.msk [vmem:[%s920] sm:$0xff] %vm919, %v918
  %s922 = scalar_lea.vmem %s0, 769
  %v923 = vld [vmem:[%s922] ss:$8 sm:$0xf]
  %s924 = scalar_lea.vmem %s0, 769
  %v925 = vld [vmem:[%s924] ss:$8 sm:$0xf0]
  %vm926 = vcmask 1047556
  %v927 = vsel %vm926, %v925, %v923
  %928 = vrot.lane.b32.xlu0 %v927, 16
  %v929 = vpop.permute.xlu0 %928
  %vm930 = vcmask 261248
  %s931 = scalar_lea.vmem %s1, 96
  %932 = vst.msk [vmem:[%s931] sm:$0xff] %vm930, %v929
  %s933 = scalar_lea.vmem %s0, 65
  %v934 = vld [vmem:[%s933] ss:$8 sm:$0xf]
  %s935 = scalar_lea.vmem %s0, 65
  %v936 = vld [vmem:[%s935] ss:$8 sm:$0xf0]
  %vm937 = vcmask 1047556
  %v938 = vsel %vm937, %v936, %v934
  %939 = vrot.lane.b32.xlu0 %v938, 16
  %v940 = vpop.permute.xlu0 %939
  %vm941 = vcmask 261248
  %s942 = scalar_lea.vmem %s1, 8
  %943 = vst.msk [vmem:[%s942] sm:$0xff] %vm941, %v940
  %s944 = scalar_lea.vmem %s0, 321
  %v945 = vld [vmem:[%s944] ss:$8 sm:$0xf]
  %s946 = scalar_lea.vmem %s0, 321
  %v947 = vld [vmem:[%s946] ss:$8 sm:$0xf0]
  %vm948 = vcmask 1047556
  %v949 = vsel %vm948, %v947, %v945
  %950 = vrot.lane.b32.xlu0 %v949, 16
  %v951 = vpop.permute.xlu0 %950
  %vm952 = vcmask 261248
  %s953 = scalar_lea.vmem %s1, 40
  %954 = vst.msk [vmem:[%s953] sm:$0xff] %vm952, %v951
  %s955 = scalar_lea.vmem %s0, 577
  %v956 = vld [vmem:[%s955] ss:$8 sm:$0xf]
  %s957 = scalar_lea.vmem %s0, 577
  %v958 = vld [vmem:[%s957] ss:$8 sm:$0xf0]
  %vm959 = vcmask 1047556
  %v960 = vsel %vm959, %v958, %v956
  %961 = vrot.lane.b32.xlu0 %v960, 16
  %v962 = vpop.permute.xlu0 %961
  %vm963 = vcmask 261248
  %s964 = scalar_lea.vmem %s1, 72
  %965 = vst.msk [vmem:[%s964] sm:$0xff] %vm963, %v962
  %s966 = scalar_lea.vmem %s0, 833
  %v967 = vld [vmem:[%s966] ss:$8 sm:$0xf]
  %s968 = scalar_lea.vmem %s0, 833
  %v969 = vld [vmem:[%s968] ss:$8 sm:$0xf0]
  %vm970 = vcmask 1047556
  %v971 = vsel %vm970, %v969, %v967
  %972 = vrot.lane.b32.xlu0 %v971, 16
  %v973 = vpop.permute.xlu0 %972
  %vm974 = vcmask 261248
  %s975 = scalar_lea.vmem %s1, 104
  %976 = vst.msk [vmem:[%s975] sm:$0xff] %vm974, %v973
  %s977 = scalar_lea.vmem %s0, 129
  %v978 = vld [vmem:[%s977] ss:$8 sm:$0xf]
  %s979 = scalar_lea.vmem %s0, 129
  %v980 = vld [vmem:[%s979] ss:$8 sm:$0xf0]
  %vm981 = vcmask 1047556
  %v982 = vsel %vm981, %v980, %v978
  %983 = vrot.lane.b32.xlu0 %v982, 16
  %v984 = vpop.permute.xlu0 %983
  %vm985 = vcmask 261248
  %s986 = scalar_lea.vmem %s1, 16
  %987 = vst.msk [vmem:[%s986] sm:$0xff] %vm985, %v984
  %s988 = scalar_lea.vmem %s0, 385
  %v989 = vld [vmem:[%s988] ss:$8 sm:$0xf]
  %s990 = scalar_lea.vmem %s0, 385
  %v991 = vld [vmem:[%s990] ss:$8 sm:$0xf0]
  %vm992 = vcmask 1047556
  %v993 = vsel %vm992, %v991, %v989
  %994 = vrot.lane.b32.xlu0 %v993, 16
  %v995 = vpop.permute.xlu0 %994
  %vm996 = vcmask 261248
  %s997 = scalar_lea.vmem %s1, 48
  %998 = vst.msk [vmem:[%s997] sm:$0xff] %vm996, %v995
  %s999 = scalar_lea.vmem %s0, 641
  %v1000 = vld [vmem:[%s999] ss:$8 sm:$0xf]
  %s1001 = scalar_lea.vmem %s0, 641
  %v1002 = vld [vmem:[%s1001] ss:$8 sm:$0xf0]
  %vm1003 = vcmask 1047556
  %v1004 = vsel %vm1003, %v1002, %v1000
  %1005 = vrot.lane.b32.xlu0 %v1004, 16
  %v1006 = vpop.permute.xlu0 %1005
  %vm1007 = vcmask 261248
  %s1008 = scalar_lea.vmem %s1, 80
  %1009 = vst.msk [vmem:[%s1008] sm:$0xff] %vm1007, %v1006
  %s1010 = scalar_lea.vmem %s0, 193
  %v1011 = vld [vmem:[%s1010] ss:$8 sm:$0xf]
  %s1012 = scalar_lea.vmem %s0, 193
  %v1013 = vld [vmem:[%s1012] ss:$8 sm:$0xf0]
  %vm1014 = vcmask 1047556
  %v1015 = vsel %vm1014, %v1013, %v1011
  %1016 = vrot.lane.b32.xlu0 %v1015, 16
  %v1017 = vpop.permute.xlu0 %1016
  %vm1018 = vcmask 261248
  %s1019 = scalar_lea.vmem %s1, 24
  %1020 = vst.msk [vmem:[%s1019] sm:$0xff] %vm1018, %v1017
  %s1021 = scalar_lea.vmem %s0, 449
  %v1022 = vld [vmem:[%s1021] ss:$8 sm:$0xf]
  %s1023 = scalar_lea.vmem %s0, 449
  %v1024 = vld [vmem:[%s1023] ss:$8 sm:$0xf0]
  %vm1025 = vcmask 1047556
  %v1026 = vsel %vm1025, %v1024, %v1022
  %1027 = vrot.lane.b32.xlu0 %v1026, 16
  %v1028 = vpop.permute.xlu0 %1027
  %vm1029 = vcmask 261248
  %s1030 = scalar_lea.vmem %s1, 56
  %1031 = vst.msk [vmem:[%s1030] sm:$0xff] %vm1029, %v1028
  %s1032 = scalar_lea.vmem %s0, 705
  %v1033 = vld [vmem:[%s1032] ss:$8 sm:$0xf]
  %s1034 = scalar_lea.vmem %s0, 705
  %v1035 = vld [vmem:[%s1034] ss:$8 sm:$0xf0]
  %vm1036 = vcmask 1047556
  %v1037 = vsel %vm1036, %v1035, %v1033
  %1038 = vrot.lane.b32.xlu0 %v1037, 16
  %v1039 = vpop.permute.xlu0 %1038
  %vm1040 = vcmask 261248
  %s1041 = scalar_lea.vmem %s1, 88
  %1042 = vst.msk [vmem:[%s1041] sm:$0xff] %vm1040, %v1039

// kernel: tile.38
$region0: #{tile.38}
  #allocation0 [shape = 's32[1]{0}', space=sflag, size = 0x4, scoped, tag = 'scoped memory for tile.38']
  %s0 = inlined_call_operand.vmem [shape: f32[8], index: 0, kind: input, shape index: {}]
  %s1 = inlined_call_operand.vmem [shape: f32[14,8], index: 1, kind: output, shape index: {}]
  // Predicated region
  $region2: #{tile.38} parent=0 // pred_check
    _
  $region3: #{tile.38} parent=0 // pred_check_branch
    %3 = sbr.rel (0) target = $region5
  $region4: #{tile.38} parent=0 // pred_region
    _
  $region5: #{tile.38} parent=0 // pred_fallthru
    _
  %v4 = vld [vmem:[%s0] ss:$0 sm:$0xff]
  %5 = vst [vmem:[%s1] sm:$0xff] %v4
  %s6 = scalar_lea.vmem %s1, 8
  %7 = vst [vmem:[%s6] sm:$0xff] %v4

// kernel: tile.39
$region0: #{tile.39}
  %s0 = inlined_call_operand.vmem [shape: f32[14,8], index: 0, kind: input, shape index: {}]
  %s1 = inlined_call_operand.vmem [shape: f32[112], index: 1, kind: output, shape index: {}]
  $region1: #{tile.39} parent=0
    #allocation0 [shape = 'u8[4096]{0}', space=vmem, size = 0x1000, scoped, tag = 'scoped mem for output reshape']
    %v2 = vld [vmem:[%s0] sm:$0x1]
    %vm3 = vcmask 64512
    %4 = vst.msk [vmem:[#allocation0] sm:$0x1] %vm3, %v2
    %s5 = scalar_lea.vmem %s0, 13
    %v6 = vld [vmem:[%s5] sm:$0x1]
    %7 = vrot.lane.b32.xlu0 %v6, 104
    %v8 = vpop.permute.xlu0 %7
    %vm9 = vcmask 917312
    %10 = vst.msk [vmem:[#allocation0] sm:$0x1] %vm9, %v8
    %s11 = scalar_lea.vmem %s0, 12
    %v12 = vld [vmem:[%s11] sm:$0x1]
    %13 = vrot.lane.b32.xlu0 %v12, 96
    %v14 = vpop.permute.xlu0 %13
    %vm15 = vcmask 851712
    %16 = vst.msk [vmem:[#allocation0] sm:$0x1] %vm15, %v14
    %s17 = scalar_lea.vmem %s0, 11
    %v18 = vld [vmem:[%s17] sm:$0x1]
    %19 = vrot.lane.b32.xlu0 %v18, 88
    %v20 = vpop.permute.xlu0 %19
    %vm21 = vcmask 786112
    %22 = vst.msk [vmem:[#allocation0] sm:$0x1] %vm21, %v20
    %s23 = scalar_lea.vmem %s0, 10
    %v24 = vld [vmem:[%s23] sm:$0x1]
    %25 = vrot.lane.b32.xlu0 %v24, 80
    %v26 = vpop.permute.xlu0 %25
    %vm27 = vcmask 720512
    %28 = vst.msk [vmem:[#allocation0] sm:$0x1] %vm27, %v26
    %s29 = scalar_lea.vmem %s0, 9
    %v30 = vld [vmem:[%s29] sm:$0x1]
    %31 = vrot.lane.b32.xlu0 %v30, 72
    %v32 = vpop.permute.xlu0 %31
    %vm33 = vcmask 654912
    %34 = vst.msk [vmem:[#allocation0] sm:$0x1] %vm33, %v32
    %s35 = scalar_lea.vmem %s0, 8
    %v36 = vld [vmem:[%s35] sm:$0x1]
    %37 = vrot.lane.b32.xlu0 %v36, 64
    %v38 = vpop.permute.xlu0 %37
    %vm39 = vcmask 589312
    %40 = vst.msk [vmem:[#allocation0] sm:$0x1] %vm39, %v38
    %s41 = scalar_lea.vmem %s0, 7
    %v42 = vld [vmem:[%s41] sm:$0x1]
    %43 = vrot.lane.b32.xlu0 %v42, 56
    %v44 = vpop.permute.xlu0 %43
    %vm45 = vcmask 523712
    %46 = vst.msk [vmem:[#allocation0] sm:$0x1] %vm45, %v44
    %s47 = scalar_lea.vmem %s0, 6
    %v48 = vld [vmem:[%s47] sm:$0x1]
    %49 = vrot.lane.b32.xlu0 %v48, 48
    %v50 = vpop.permute.xlu0 %49
    %vm51 = vcmask 458112
    %52 = vst.msk [vmem:[#allocation0] sm:$0x1] %vm51, %v50
    %s53 = scalar_lea.vmem %s0, 5
    %v54 = vld [vmem:[%s53] sm:$0x1]
    %55 = vrot.lane.b32.xlu0 %v54, 40
    %v56 = vpop.permute.xlu0 %55
    %vm57 = vcmask 392512
    %58 = vst.msk [vmem:[#allocation0] sm:$0x1] %vm57, %v56
    %s59 = scalar_lea.vmem %s0, 4
    %v60 = vld [vmem:[%s59] sm:$0x1]
    %61 = vrot.lane.b32.xlu0 %v60, 32
    %v62 = vpop.permute.xlu0 %61
    %vm63 = vcmask 326912
    %64 = vst.msk [vmem:[#allocation0] sm:$0x1] %vm63, %v62
    %s65 = scalar_lea.vmem %s0, 3
    %v66 = vld [vmem:[%s65] sm:$0x1]
    %67 = vrot.lane.b32.xlu0 %v66, 24
    %v68 = vpop.permute.xlu0 %67
    %vm69 = vcmask 261312
    %70 = vst.msk [vmem:[#allocation0] sm:$0x1] %vm69, %v68
    %s71 = scalar_lea.vmem %s0, 2
    %v72 = vld [vmem:[%s71] sm:$0x1]
    %73 = vrot.lane.b32.xlu0 %v72, 16
    %v74 = vpop.permute.xlu0 %73
    %vm75 = vcmask 195712
    %76 = vst.msk [vmem:[#allocation0] sm:$0x1] %vm75, %v74
    %s77 = scalar_lea.vmem %s0, 1
    %v78 = vld [vmem:[%s77] sm:$0x1]
    %79 = vrot.lane.b32.xlu0 %v78, 8
    %v80 = vpop.permute.xlu0 %79
    %vm81 = vcmask 130112
    %82 = vst.msk [vmem:[#allocation0] sm:$0x1] %vm81, %v80
    %s84 = ssub.s32 2, 1
    %v85 = vld [vmem:[#allocation0] sm:%s84]
    %s87 = ssub.s32 2, 1
    %88 = vst [vmem:[%s1] sm:%s87] %v85

// kernel: tile.53
$region0: #{tile.53}
  #allocation0 [shape = 's32[1]{0}', space=sflag, size = 0x4, scoped, tag = 'scoped memory for tile.53']
  %s0 = inlined_call_operand.vmem [shape: f32[16], index: 0, kind: input, shape index: {}]
  %s1 = inlined_call_operand.vmem [shape: f32[7,16], index: 1, kind: output, shape index: {}]
  // Predicated region
  $region2: #{tile.53} parent=0 // pred_check
    _
  $region3: #{tile.53} parent=0 // pred_check_branch
    %3 = sbr.rel (0) target = $region5
  $region4: #{tile.53} parent=0 // pred_region
    _
  $region5: #{tile.53} parent=0 // pred_fallthru
    _
  %v4 = vld [vmem:[%s0] ss:$0 sm:$0xff]
  %5 = vst [vmem:[%s1] sm:$0xff] %v4

// kernel: tile.54
$region0: #{tile.54}
  %s0 = inlined_call_operand.vmem [shape: f32[7,16], index: 0, kind: input, shape index: {}]
  %s1 = inlined_call_operand.vmem [shape: f32[112], index: 1, kind: output, shape index: {}]
  $region1: #{tile.54} parent=0
    #allocation0 [shape = 'u8[4096]{0}', space=vmem, size = 0x1000, scoped, tag = 'scoped mem for output reshape']
    %v2 = vld [vmem:[%s0] sm:$0x1]
    %vm3 = vcmask 130048
    %4 = vst.msk [vmem:[#allocation0] sm:$0x1] %vm3, %v2
    %s5 = scalar_lea.vmem %s0, 6
    %v6 = vld [vmem:[%s5] sm:$0x1]
    %7 = vrot.lane.b32.xlu0 %v6, 96
    %v8 = vpop.permute.xlu0 %7
    %vm9 = vcmask 917248
    %10 = vst.msk [vmem:[#allocation0] sm:$0x1] %vm9, %v8
    %s11 = scalar_lea.vmem %s0, 5
    %v12 = vld [vmem:[%s11] sm:$0x1]
    %13 = vrot.lane.b32.xlu0 %v12, 80
    %v14 = vpop.permute.xlu0 %13
    %vm15 = vcmask 786048
    %16 = vst.msk [vmem:[#allocation0] sm:$0x1] %vm15, %v14
    %s17 = scalar_lea.vmem %s0, 4
    %v18 = vld [vmem:[%s17] sm:$0x1]
    %19 = vrot.lane.b32.xlu0 %v18, 64
    %v20 = vpop.permute.xlu0 %19
    %vm21 = vcmask 654848
    %22 = vst.msk [vmem:[#allocation0] sm:$0x1] %vm21, %v20
    %s23 = scalar_lea.vmem %s0, 3
    %v24 = vld [vmem:[%s23] sm:$0x1]
    %25 = vrot.lane.b32.xlu0 %v24, 48
    %v26 = vpop.permute.xlu0 %25
    %vm27 = vcmask 523648
    %28 = vst.msk [vmem:[#allocation0] sm:$0x1] %vm27, %v26
    %s29 = scalar_lea.vmem %s0, 2
    %v30 = vld [vmem:[%s29] sm:$0x1]
    %31 = vrot.lane.b32.xlu0 %v30, 32
    %v32 = vpop.permute.xlu0 %31
    %vm33 = vcmask 392448
    %34 = vst.msk [vmem:[#allocation0] sm:$0x1] %vm33, %v32
    %s35 = scalar_lea.vmem %s0, 1
    %v36 = vld [vmem:[%s35] sm:$0x1]
    %37 = vrot.lane.b32.xlu0 %v36, 16
    %v38 = vpop.permute.xlu0 %37
    %vm39 = vcmask 261248
    %40 = vst.msk [vmem:[#allocation0] sm:$0x1] %vm39, %v38
    %s42 = ssub.s32 2, 1
    %v43 = vld [vmem:[#allocation0] sm:%s42]
    %s45 = ssub.s32 2, 1
    %46 = vst [vmem:[%s1] sm:%s45] %v43

// kernel: tile.59
$region0: #{tile.59}
  %s0 = inlined_call_operand.vmem [shape: f32[3,32], index: 0, kind: input, shape index: {}]
  %s1 = inlined_call_operand.vmem [shape: f32[96], index: 1, kind: output, shape index: {}]
  $region1: #{tile.59} parent=0
    #allocation0 [shape = 'u8[4096]{0}', space=vmem, size = 0x1000, scoped, tag = 'scoped mem for output reshape']
    #allocation1 [shape = 'u8[4096]{0}', space=vmem, size = 0x1000, scoped, tag = 'scoped mem for input reshape']
    %s3 = ssub.s32 16, 1
    %v4 = vld [vmem:[%s0] sm:%s3]
    %5 = vst [vmem:[#allocation1] sm:%s3] %v4
    %v6 = vld [vmem:[#allocation1] sm:$0x1]
    %vm7 = vcmask 261120
    %8 = vst.msk [vmem:[#allocation0] sm:$0x1] %vm7, %v6
    %s9 = scalar_lea.vmem [#allocation1], 2
    %v10 = vld [vmem:[%s9] sm:$0x1]
    %11 = vrot.lane.b32.xlu0 %v10, 64
    %v12 = vpop.permute.xlu0 %11
    %vm13 = vcmask 785920
    %14 = vst.msk [vmem:[#allocation0] sm:$0x1] %vm13, %v12
    %s15 = scalar_lea.vmem [#allocation1], 1
    %v16 = vld [vmem:[%s15] sm:$0x1]
    %17 = vrot.lane.b32.xlu0 %v16, 32
    %v18 = vpop.permute.xlu0 %17
    %vm19 = vcmask 523520
    %20 = vst.msk [vmem:[#allocation0] sm:$0x1] %vm19, %v18
    %s22 = ssub.s32 2, 1
    %v23 = vld [vmem:[#allocation0] sm:%s22]
    %s25 = ssub.s32 2, 1
    %26 = vst [vmem:[%s1] sm:%s25] %v23

// kernel: tile.58
$region0: #{tile.58}
  #allocation0 [shape = 's32[1]{0}', space=sflag, size = 0x4, scoped, tag = 'scoped memory for tile.58']
  %s0 = inlined_call_operand.vmem [shape: f32[32], index: 0, kind: input, shape index: {}]
  %s1 = inlined_call_operand.vmem [shape: f32[3,32], index: 1, kind: output, shape index: {}]
  // Predicated region
  $region2: #{tile.58} parent=0 // pred_check
    _
  $region3: #{tile.58} parent=0 // pred_check_branch
    %3 = sbr.rel (0) target = $region5
  $region4: #{tile.58} parent=0 // pred_region
    _
  $region5: #{tile.58} parent=0 // pred_fallthru
    _
  %v4 = vld [vmem:[%s0] ss:$0 sm:$0xff]
  %5 = vst [vmem:[%s1] sm:$0xf] %v4

// kernel: variational_encoder_forward.1
$region0: #{variational_encoder_forward.1}
  #allocation0 [shape = 'u32[]', space=smem, size = 0x4, offset = 0x4, fixed_abs, tag = 'smem constant byte address 0x4 - core index']
  #allocation1 [shape = 'u32[72,128]{1,0:T(1,128)}', space=vmem, size = 0x9000, scoped, tag = 'internal scratch']
  #allocation2 [shape = 'f32[40,112]{1,0:T(8,128)}', space=vmem, size = 0x5000, scoped, tag = 'scratch operand']
  #allocation3 [shape = 'f32[24,112]{1,0:T(8,128)}', space=vmem, size = 0x3000, scoped, tag = 'scratch operand']
  #allocation4 [shape = 'f32[8,96]{1,0:T(8,128)}', space=vmem, size = 0x1000, scoped, tag = 'scratch operand']
  %s0 = inlined_call_operand.vmem [shape: f32[72,84], index: 0, kind: input, shape index: {}]
  %s1 = inlined_call_operand.vmem [shape: bf16[3,84,112], index: 1, kind: input, shape index: {}]
  %s2 = inlined_call_operand.vmem [shape: bf16[3,112,112], index: 2, kind: input, shape index: {}]
  %s3 = inlined_call_operand.vmem [shape: bf16[3,112,96], index: 3, kind: input, shape index: {}]
  %s4 = inlined_call_operand.vmem [shape: bf16[3,96,128], index: 4, kind: input, shape index: {}]
  %s5 = inlined_call_operand.vmem [shape: bf16[128,16], index: 5, kind: input, shape index: {}]
  %s6 = inlined_call_operand.vmem [shape: f32[112,112], index: 6, kind: input, shape index: {}]
  %s7 = inlined_call_operand.vmem [shape: f32[8,128], index: 7, kind: input, shape index: {}]
  %s8 = inlined_call_operand.vmem [shape: f32[2,8], index: 8, kind: input, shape index: {}]
  %s9 = inlined_call_operand.hbm [shape: f32[2,8], index: 9, kind: output, shape index: {0}]
  %s10 = inlined_call_operand.hbm [shape: f32[1,1], index: 10, kind: output, shape index: {1}]
  %11 = xla_tuple %s9, %s10
  %s12 = sld [smem:[#allocation0]]
  $region54: #{variational_encoder_forward.1} parent=0
    _
  %s14 = ssub.s32 1, %s12
  %s15 = scalar_select 0, %s14, %s12
  $region1: #{variational_encoder_forward.1} parent=0
    #allocation5 [shape = 'u8[1024]{0}', space=vmem, size = 0x400, scoped, tag = 'output window, operand 0, single buffered']
    #allocation6 [shape = 's32[1]{0}', space=sflag, size = 0x4, scoped, tag = 'scoped memory for variational_encoder_forward.1']
    #allocation7 [shape = 'u8[512]{0}', space=vmem, size = 0x400, scoped, tag = 'output window, operand 1, single buffered']
    #allocation8 [shape = 's32[1]{0}', space=sflag, size = 0x4, scoped, tag = 'scoped memory for variational_encoder_forward.1']
    %16 = vsyncpa [#allocation6], 0
    %17 = vsyncpa [#allocation8], 0
    // Predicated region
    $region2: #{variational_encoder_forward.1} parent=1 // pred_check
      _
    $region3: #{variational_encoder_forward.1} parent=1 // pred_check_branch
      %19 = sbr.rel (0) target = $region5
    $region4: #{variational_encoder_forward.1} parent=1 // pred_region
      _
    $region5: #{variational_encoder_forward.1} parent=1 // pred_fallthru
      _
    // Predicated region
    $region6: #{variational_encoder_forward.1} parent=1 // pred_check
      _
    $region7: #{variational_encoder_forward.1} parent=1 // pred_check_branch
      %21 = sbr.rel (0) target = $region9
    $region8: #{variational_encoder_forward.1} parent=1 // pred_region
      _
    $region9: #{variational_encoder_forward.1} parent=1 // pred_fallthru
      _
    // Predicated region
    $region10: #{variational_encoder_forward.1} parent=1 // pred_check
      _
    $region11: #{variational_encoder_forward.1} parent=1 // pred_check_branch
      %23 = sbr.rel (0) target = $region13
    $region12: #{variational_encoder_forward.1} parent=1 // pred_region
      _
    $region13: #{variational_encoder_forward.1} parent=1 // pred_fallthru
      _
    // Predicated region
    $region14: #{variational_encoder_forward.1} parent=1 // pred_check
      _
    $region15: #{variational_encoder_forward.1} parent=1 // pred_check_branch
      %25 = sbr.rel (0) target = $region17
    $region16: #{variational_encoder_forward.1} parent=1 // pred_region
      _
    $region17: #{variational_encoder_forward.1} parent=1 // pred_fallthru
      _
    // Predicated region
    $region18: #{variational_encoder_forward.1} parent=1 // pred_check
      _
    $region19: #{variational_encoder_forward.1} parent=1 // pred_check_branch
      %27 = sbr.rel (0) target = $region21
    $region20: #{variational_encoder_forward.1} parent=1 // pred_region
      _
    $region21: #{variational_encoder_forward.1} parent=1 // pred_fallthru
      _
    // Predicated region
    $region22: #{variational_encoder_forward.1} parent=1 // pred_check
      _
    $region23: #{variational_encoder_forward.1} parent=1 // pred_check_branch
      %29 = sbr.rel (0) target = $region25
    $region24: #{variational_encoder_forward.1} parent=1 // pred_region
      _
    $region25: #{variational_encoder_forward.1} parent=1 // pred_fallthru
      _
    // Predicated region
    $region26: #{variational_encoder_forward.1} parent=1 // pred_check
      _
    $region27: #{variational_encoder_forward.1} parent=1 // pred_check_branch
      %31 = sbr.rel (0) target = $region29
    $region28: #{variational_encoder_forward.1} parent=1 // pred_region
      _
    $region29: #{variational_encoder_forward.1} parent=1 // pred_fallthru
      _
    // Predicated region
    $region30: #{variational_encoder_forward.1} parent=1 // pred_check
      _
    $region31: #{variational_encoder_forward.1} parent=1 // pred_check_branch
      %33 = sbr.rel (0) target = $region33
    $region32: #{variational_encoder_forward.1} parent=1 // pred_region
      _
    $region33: #{variational_encoder_forward.1} parent=1 // pred_fallthru
      _
    // Predicated region
    $region34: #{variational_encoder_forward.1} parent=1 // pred_check
      _
    $region35: #{variational_encoder_forward.1} parent=1 // pred_check_branch
      %35 = sbr.rel (0) target = $region37
    $region36: #{variational_encoder_forward.1} parent=1 // pred_region
      _
    $region37: #{variational_encoder_forward.1} parent=1 // pred_fallthru
      _
    %v37 = vld [vmem:[%s7] sm:$0xff]
    %v38 = vld [vmem:[%s0] ss:$2 sm:$0xff]
    %s39 = scalar_lea.vmem %s0, 16
    %v40 = vld [vmem:[%s39] ss:$2 sm:$0xff]
    %s41 = scalar_lea.vmem %s0, 32
    %v42 = vld [vmem:[%s41] ss:$2 sm:$0xff]
    %s43 = scalar_lea.vmem %s0, 48
    %v44 = vld [vmem:[%s43] ss:$2 sm:$0xff]
    %v45 = vpack.c.bf16 %v40, %v38
    %v46 = vpack.c.bf16 %v44, %v42
    %v47 = vld [vmem:[%s1] sm:$0xf]
    %v48 = vld [vmem:[%s1 + $0x4] sm:$0xf]
    %v49 = vld [vmem:[%s1 + $0x8] sm:$0xf]
    %v50 = vld [vmem:[%s1 + $0xc] sm:$0xf]
    %v51 = vld [vmem:[%s1 + $0x10] sm:$0xf]
    %v52 = vld [vmem:[%s1 + $0x14] sm:$0xf]
    %v53 = vld [vmem:[%s1 + $0x18] sm:$0xf]
    %v54 = vld [vmem:[%s1 + $0x1c] sm:$0xf]
    %v55 = vld [vmem:[%s1 + $0x20] sm:$0xf]
    %v56 = vld [vmem:[%s1 + $0x24] sm:$0xf]
    %v57 = vld [vmem:[%s1 + $0x28] sm:$0x3]
    %s58 = scalar_lea.vmem %s0, 1
    %v59 = vld [vmem:[%s58] ss:$2 sm:$0xff]
    %s60 = scalar_lea.vmem %s0, 17
    %v61 = vld [vmem:[%s60] ss:$2 sm:$0xff]
    %s62 = scalar_lea.vmem %s0, 33
    %v63 = vld [vmem:[%s62] ss:$2 sm:$0xff]
    %s64 = scalar_lea.vmem %s0, 49
    %v65 = vld [vmem:[%s64] ss:$2 sm:$0xff]
    %v66 = vpack.c.bf16 %v61, %v59
    %v67 = vpack.c.bf16 %v65, %v63
    %s68 = scalar_lea.vmem %s1, 44
    %v69 = vld [vmem:[%s68] sm:$0xf]
    %v70 = vld [vmem:[%s68 + $0x4] sm:$0xf]
    %v71 = vld [vmem:[%s68 + $0x8] sm:$0xf]
    %v72 = vld [vmem:[%s68 + $0xc] sm:$0xf]
    %v73 = vld [vmem:[%s68 + $0x10] sm:$0xf]
    %v74 = vld [vmem:[%s68 + $0x14] sm:$0xf]
    %v75 = vld [vmem:[%s68 + $0x18] sm:$0xf]
    %v76 = vld [vmem:[%s68 + $0x1c] sm:$0xf]
    %v77 = vld [vmem:[%s68 + $0x20] sm:$0xf]
    %v78 = vld [vmem:[%s68 + $0x24] sm:$0xf]
    %v79 = vld [vmem:[%s68 + $0x28] sm:$0x3]
    %v91 = vunpack.c.l.b16 %v69
    %v92 = vunpack.c.l.b16 %v70
    %v93 = vunpack.c.l.b16 %v71
    %v94 = vunpack.c.l.b16 %v72
    %v95 = vunpack.c.l.b16 %v73
    %v96 = vunpack.c.l.b16 %v74
    %v97 = vunpack.c.l.b16 %v75
    %v98 = vunpack.c.l.b16 %v76
    %v99 = vunpack.c.l.b16 %v77
    %v100 = vunpack.c.l.b16 %v78
    %v101 = vunpack.c.l.b16 %v79
    %v102 = vpack.c.b16 %v92, %v91
    %v103 = vpack.c.b16 %v94, %v93
    %v104 = vpack.c.b16 %v96, %v95
    %v105 = vpack.c.b16 %v98, %v97
    %v106 = vpack.c.b16 %v100, %v99
    %v107 = vpack.c.b16 %v101, %v101
    %vm113 = vcmask 687104
    %v115 = vsel %vm113, %v66, 0
    %v118 = vsel %vm113, %v67, 0
    %vm120 = vcmask 1041408
    %v122 = vsel %vm120, %v107, 0
    %124 = vmatpush.bf16.msra.mxu0 0
    %125 = vmatpush.bf16.msra.mxu0 0
    %126 = vmatpush.bf16.msra.mxu0 %v122
    %127 = vmatpush.bf16.msra.mxu0 %v106
    %128 = vmatpush.bf16.msra.mxu0 %v105
    %129 = vmatpush.bf16.msra.mxu0 %v104
    %130 = vmatpush.bf16.msra.mxu0 %v103
    %131 = vmatpush.bf16.msra.mxu0 %v102
    %132 = vmatmul.bf16.gmra.mxu0 %v115
    %v133 = vpop.f32.mrf.mxu0
    %v134 = vadd.f32 0.0, %v133
    %v135 = vpop.f32.mrf.mxu0
    %v136 = vadd.f32 0.0, %v135
    %137 = vmatmul.bf16.gmra.mxu0 %v118
    %v138 = vpop.f32.mrf.mxu0
    %v139 = vadd.f32 0.0, %v138
    %v140 = vpop.f32.mrf.mxu0
    %v141 = vadd.f32 0.0, %v140
    %142 = vdwg.mxu0
    %v154 = vunpack.c.l.b16 %v47
    %v155 = vunpack.c.l.b16 %v48
    %v156 = vunpack.c.l.b16 %v49
    %v157 = vunpack.c.l.b16 %v50
    %v158 = vunpack.c.l.b16 %v51
    %v159 = vunpack.c.l.b16 %v52
    %v160 = vunpack.c.l.b16 %v53
    %v161 = vunpack.c.l.b16 %v54
    %v162 = vunpack.c.l.b16 %v55
    %v163 = vunpack.c.l.b16 %v56
    %v164 = vunpack.c.l.b16 %v57
    %v165 = vpack.c.b16 %v155, %v154
    %v166 = vpack.c.b16 %v157, %v156
    %v167 = vpack.c.b16 %v159, %v158
    %v168 = vpack.c.b16 %v161, %v160
    %v169 = vpack.c.b16 %v163, %v162
    %v170 = vpack.c.b16 %v164, %v164
    %v177 = vsel %vm113, %v45, 0
    %v180 = vsel %vm113, %v46, 0
    %v183 = vsel %vm120, %v170, 0
    %185 = vmatpush.bf16.msra.mxu0 0
    %186 = vmatpush.bf16.msra.mxu0 0
    %187 = vmatpush.bf16.msra.mxu0 %v183
    %188 = vmatpush.bf16.msra.mxu0 %v169
    %189 = vmatpush.bf16.msra.mxu0 %v168
    %190 = vmatpush.bf16.msra.mxu0 %v167
    %191 = vmatpush.bf16.msra.mxu0 %v166
    %192 = vmatpush.bf16.msra.mxu0 %v165
    %193 = vmatmul.bf16.gmra.mxu0 %v177
    %v194 = vpop.f32.mrf.mxu0
    %v195 = vadd.f32 %v134, %v194
    %v196 = vpop.f32.mrf.mxu0
    %v197 = vadd.f32 %v136, %v196
    %198 = vmatmul.bf16.gmra.mxu0 %v180
    %v199 = vpop.f32.mrf.mxu0
    %v200 = vadd.f32 %v139, %v199
    %v201 = vpop.f32.mrf.mxu0
    %v202 = vadd.f32 %v141, %v201
    %203 = vdwg.mxu0
    %s204 = scalar_lea.vmem %s0, 2
    %v205 = vld [vmem:[%s204] ss:$2 sm:$0xff]
    %s206 = scalar_lea.vmem %s0, 18
    %v207 = vld [vmem:[%s206] ss:$2 sm:$0xff]
    %s208 = scalar_lea.vmem %s0, 34
    %v209 = vld [vmem:[%s208] ss:$2 sm:$0xff]
    %s210 = scalar_lea.vmem %s0, 50
    %v211 = vld [vmem:[%s210] ss:$2 sm:$0xff]
    %v212 = vpack.c.bf16 %v207, %v205
    %v213 = vpack.c.bf16 %v211, %v209
    %s214 = scalar_lea.vmem %s1, 88
    %v215 = vld [vmem:[%s214] sm:$0xf]
    %v216 = vld [vmem:[%s214 + $0x4] sm:$0xf]
    %v217 = vld [vmem:[%s214 + $0x8] sm:$0xf]
    %v218 = vld [vmem:[%s214 + $0xc] sm:$0xf]
    %v219 = vld [vmem:[%s214 + $0x10] sm:$0xf]
    %v220 = vld [vmem:[%s214 + $0x14] sm:$0xf]
    %v221 = vld [vmem:[%s214 + $0x18] sm:$0xf]
    %v222 = vld [vmem:[%s214 + $0x1c] sm:$0xf]
    %v223 = vld [vmem:[%s214 + $0x20] sm:$0xf]
    %v224 = vld [vmem:[%s214 + $0x24] sm:$0xf]
    %v225 = vld [vmem:[%s214 + $0x28] sm:$0x3]
    %v237 = vunpack.c.l.b16 %v215
    %v238 = vunpack.c.l.b16 %v216
    %v239 = vunpack.c.l.b16 %v217
    %v240 = vunpack.c.l.b16 %v218
    %v241 = vunpack.c.l.b16 %v219
    %v242 = vunpack.c.l.b16 %v220
    %v243 = vunpack.c.l.b16 %v221
    %v244 = vunpack.c.l.b16 %v222
    %v245 = vunpack.c.l.b16 %v223
    %v246 = vunpack.c.l.b16 %v224
    %v247 = vunpack.c.l.b16 %v225
    %v248 = vpack.c.b16 %v238, %v237
    %v249 = vpack.c.b16 %v240, %v239
    %v250 = vpack.c.b16 %v242, %v241
    %v251 = vpack.c.b16 %v244, %v243
    %v252 = vpack.c.b16 %v246, %v245
    %v253 = vpack.c.b16 %v247, %v247
    %v260 = vsel %vm113, %v212, 0
    %v263 = vsel %vm113, %v213, 0
    %v266 = vsel %vm120, %v253, 0
    %268 = vmatpush.bf16.msra.mxu0 0
    %269 = vmatpush.bf16.msra.mxu0 0
    %270 = vmatpush.bf16.msra.mxu0 %v266
    %271 = vmatpush.bf16.msra.mxu0 %v252
    %272 = vmatpush.bf16.msra.mxu0 %v251
    %273 = vmatpush.bf16.msra.mxu0 %v250
    %274 = vmatpush.bf16.msra.mxu0 %v249
    %275 = vmatpush.bf16.msra.mxu0 %v248
    %276 = vmatmul.bf16.gmra.mxu0 %v260
    %v277 = vpop.f32.mrf.mxu0
    %v278 = vadd.f32 0.0, %v277
    %v279 = vpop.f32.mrf.mxu0
    %v280 = vadd.f32 0.0, %v279
    %281 = vmatmul.bf16.gmra.mxu0 %v263
    %v282 = vpop.f32.mrf.mxu0
    %v283 = vadd.f32 0.0, %v282
    %v284 = vpop.f32.mrf.mxu0
    %v285 = vadd.f32 0.0, %v284
    %286 = vdwg.mxu0
    %v287 = vadd.f32 %v195, %v278
    %v288 = vadd.f32 %v197, %v280
    %v289 = vadd.f32 %v200, %v283
    %v290 = vadd.f32 %v202, %v285
    %v291 = vperm.slane %v37, 0
    %v292 = vadd.f32 %v287, %v291
    %v293 = vadd.f32 %v288, %v291
    %v294 = vadd.f32 %v289, %v291
    %v295 = vadd.f32 %v290, %v291
    %v296 = vmax.f32 %v292, 0.0
    %v297 = vmax.f32 %v293, 0.0
    %v298 = vmax.f32 %v294, 0.0
    %v299 = vmax.f32 %v295, 0.0
    %v300 = vlaneseq
    %v301 = vshrl.u32 %v300, 7
    %v302 = vadd.s32 %v301, 8
    %v303 = vadd.s32 %v301, 16
    %v304 = vadd.s32 %v301, 24
    %v305 = vand.u32 %v301, 15
    %v306 = vand.u32 %v302, 15
    %v307 = vand.u32 %v303, 15
    %v308 = vand.u32 %v304, 15
    %vm309 = vcmp.ge.s32.totalorder %v305, 1
    %vm310 = vcmp.ge.s32.totalorder %v306, 1
    %vm311 = vcmp.ge.s32.totalorder %v307, 1
    %vm312 = vcmp.ge.s32.totalorder %v308, 1
    %vm313 = vcmp.le.s32.totalorder %v305, 14
    %vm314 = vcmp.le.s32.totalorder %v306, 14
    %vm315 = vcmp.le.s32.totalorder %v307, 14
    %vm316 = vcmp.le.s32.totalorder %v308, 14
    %vm317 = vmand %vm309, %vm313
    %vm318 = vmand %vm310, %vm314
    %vm319 = vmand %vm311, %vm315
    %vm320 = vmand %vm312, %vm316
    %v321 = vsel %vm317, 1, 0
    %v322 = vsel %vm318, 1, 0
    %v323 = vsel %vm319, 1, 0
    %v324 = vsel %vm320, 1, 0
    %vm325 = vcmp.eq.s32.totalorder %v321, 1
    %vm326 = vcmp.eq.s32.totalorder %v322, 1
    %vm327 = vcmp.eq.s32.totalorder %v323, 1
    %vm328 = vcmp.eq.s32.totalorder %v324, 1
    %v329 = vsel %vm325, %v296, 0.0
    %v330 = vsel %vm326, %v297, 0.0
    %v331 = vsel %vm327, %v298, 0.0
    %v332 = vsel %vm328, %v299, 0.0
    %vm333 = vcmask 916480
    %334 = vst.msk [vmem:[#allocation2] sm:$0xff] %vm333, %v329
    %335 = vst.msk [vmem:[#allocation2 + $0x8] sm:$0xff] %vm333, %v330
    %336 = vst.msk [vmem:[#allocation2 + $0x10] sm:$0xff] %vm333, %v331
    %337 = vst.msk [vmem:[#allocation2 + $0x18] sm:$0xff] %vm333, %v332
    %338 = vst.msk [vmem:[#allocation2 + $0x20] sm:$0xff] %vm333, 0.0
    %v339 = vld [vmem:[#allocation2] ss:$2 sm:$0xff]
    %s340 = scalar_lea.vmem [#allocation2], 16
    %v341 = vld [vmem:[%s340] ss:$2 sm:$0xff]
    %v342 = vpack.c.bf16 %v341, %v339
    %v343 = vld [vmem:[%s2] sm:$0xf]
    %v344 = vld [vmem:[%s2 + $0x4] sm:$0xf]
    %v345 = vld [vmem:[%s2 + $0x8] sm:$0xf]
    %v346 = vld [vmem:[%s2 + $0xc] sm:$0xf]
    %v347 = vld [vmem:[%s2 + $0x10] sm:$0xf]
    %v348 = vld [vmem:[%s2 + $0x14] sm:$0xf]
    %v349 = vld [vmem:[%s2 + $0x18] sm:$0xf]
    %v350 = vld [vmem:[%s2 + $0x1c] sm:$0xf]
    %v351 = vld [vmem:[%s2 + $0x20] sm:$0xf]
    %v352 = vld [vmem:[%s2 + $0x24] sm:$0xf]
    %v353 = vld [vmem:[%s2 + $0x28] sm:$0xf]
    %v354 = vld [vmem:[%s2 + $0x2c] sm:$0xf]
    %v355 = vld [vmem:[%s2 + $0x30] sm:$0xf]
    %v356 = vld [vmem:[%s2 + $0x34] sm:$0xf]
    %s357 = scalar_lea.vmem [#allocation2], 1
    %v358 = vld [vmem:[%s357] ss:$2 sm:$0xff]
    %s359 = scalar_lea.vmem [#allocation2], 17
    %v360 = vld [vmem:[%s359] ss:$2 sm:$0xff]
    %v361 = vpack.c.bf16 %v360, %v358
    %s362 = scalar_lea.vmem %s2, 56
    %v363 = vld [vmem:[%s362] sm:$0xf]
    %v364 = vld [vmem:[%s362 + $0x4] sm:$0xf]
    %v365 = vld [vmem:[%s362 + $0x8] sm:$0xf]
    %v366 = vld [vmem:[%s362 + $0xc] sm:$0xf]
    %v367 = vld [vmem:[%s362 + $0x10] sm:$0xf]
    %v368 = vld [vmem:[%s362 + $0x14] sm:$0xf]
    %v369 = vld [vmem:[%s362 + $0x18] sm:$0xf]
    %v370 = vld [vmem:[%s362 + $0x1c] sm:$0xf]
    %v371 = vld [vmem:[%s362 + $0x20] sm:$0xf]
    %v372 = vld [vmem:[%s362 + $0x24] sm:$0xf]
    %v373 = vld [vmem:[%s362 + $0x28] sm:$0xf]
    %v374 = vld [vmem:[%s362 + $0x2c] sm:$0xf]
    %v375 = vld [vmem:[%s362 + $0x30] sm:$0xf]
    %v376 = vld [vmem:[%s362 + $0x34] sm:$0xf]
    %v391 = vunpack.c.l.b16 %v363
    %v392 = vunpack.c.l.b16 %v364
    %v393 = vunpack.c.l.b16 %v365
    %v394 = vunpack.c.l.b16 %v366
    %v395 = vunpack.c.l.b16 %v367
    %v396 = vunpack.c.l.b16 %v368
    %v397 = vunpack.c.l.b16 %v369
    %v398 = vunpack.c.l.b16 %v370
    %v399 = vunpack.c.l.b16 %v371
    %v400 = vunpack.c.l.b16 %v372
    %v401 = vunpack.c.l.b16 %v373
    %v402 = vunpack.c.l.b16 %v374
    %v403 = vunpack.c.l.b16 %v375
    %v404 = vunpack.c.l.b16 %v376
    %v405 = vpack.c.b16 %v392, %v391
    %v406 = vpack.c.b16 %v394, %v393
    %v407 = vpack.c.b16 %v396, %v395
    %v408 = vpack.c.b16 %v398, %v397
    %v409 = vpack.c.b16 %v400, %v399
    %v410 = vpack.c.b16 %v402, %v401
    %v411 = vpack.c.b16 %v404, %v403
    %v420 = vsel %vm333, %v361, 0
    %422 = vmatpush.bf16.msra.mxu0 0
    %423 = vmatpush.bf16.msra.mxu0 %v411
    %424 = vmatpush.bf16.msra.mxu0 %v410
    %425 = vmatpush.bf16.msra.mxu0 %v409
    %426 = vmatpush.bf16.msra.mxu0 %v408
    %427 = vmatpush.bf16.msra.mxu0 %v407
    %428 = vmatpush.bf16.msra.mxu0 %v406
    %429 = vmatpush.bf16.msra.mxu0 %v405
    %430 = vmatmul.bf16.gmra.mxu0 %v420
    %v431 = vpop.f32.mrf.mxu0
    %v432 = vadd.f32 0.0, %v431
    %v433 = vpop.f32.mrf.mxu0
    %v434 = vadd.f32 0.0, %v433
    %435 = vdwg.mxu0
    %v450 = vunpack.c.l.b16 %v343
    %v451 = vunpack.c.l.b16 %v344
    %v452 = vunpack.c.l.b16 %v345
    %v453 = vunpack.c.l.b16 %v346
    %v454 = vunpack.c.l.b16 %v347
    %v455 = vunpack.c.l.b16 %v348
    %v456 = vunpack.c.l.b16 %v349
    %v457 = vunpack.c.l.b16 %v350
    %v458 = vunpack.c.l.b16 %v351
    %v459 = vunpack.c.l.b16 %v352
    %v460 = vunpack.c.l.b16 %v353
    %v461 = vunpack.c.l.b16 %v354
    %v462 = vunpack.c.l.b16 %v355
    %v463 = vunpack.c.l.b16 %v356
    %v464 = vpack.c.b16 %v451, %v450
    %v465 = vpack.c.b16 %v453, %v452
    %v466 = vpack.c.b16 %v455, %v454
    %v467 = vpack.c.b16 %v457, %v456
    %v468 = vpack.c.b16 %v459, %v458
    %v469 = vpack.c.b16 %v461, %v460
    %v470 = vpack.c.b16 %v463, %v462
    %v479 = vsel %vm333, %v342, 0
    %481 = vmatpush.bf16.msra.mxu0 0
    %482 = vmatpush.bf16.msra.mxu0 %v470
    %483 = vmatpush.bf16.msra.mxu0 %v469
    %484 = vmatpush.bf16.msra.mxu0 %v468
    %485 = vmatpush.bf16.msra.mxu0 %v467
    %486 = vmatpush.bf16.msra.mxu0 %v466
    %487 = vmatpush.bf16.msra.mxu0 %v465
    %488 = vmatpush.bf16.msra.mxu0 %v464
    %489 = vmatmul.bf16.gmra.mxu0 %v479
    %v490 = vpop.f32.mrf.mxu0
    %v491 = vadd.f32 %v432, %v490
    %v492 = vpop.f32.mrf.mxu0
    %v493 = vadd.f32 %v434, %v492
    %494 = vdwg.mxu0
    %s495 = scalar_lea.vmem [#allocation2], 2
    %v496 = vld [vmem:[%s495] ss:$2 sm:$0xff]
    %s497 = scalar_lea.vmem [#allocation2], 18
    %v498 = vld [vmem:[%s497] ss:$2 sm:$0xff]
    %v499 = vpack.c.bf16 %v498, %v496
    %s500 = scalar_lea.vmem %s2, 112
    %v501 = vld [vmem:[%s500] sm:$0xf]
    %v502 = vld [vmem:[%s500 + $0x4] sm:$0xf]
    %v503 = vld [vmem:[%s500 + $0x8] sm:$0xf]
    %v504 = vld [vmem:[%s500 + $0xc] sm:$0xf]
    %v505 = vld [vmem:[%s500 + $0x10] sm:$0xf]
    %v506 = vld [vmem:[%s500 + $0x14] sm:$0xf]
    %v507 = vld [vmem:[%s500 + $0x18] sm:$0xf]
    %v508 = vld [vmem:[%s500 + $0x1c] sm:$0xf]
    %v509 = vld [vmem:[%s500 + $0x20] sm:$0xf]
    %v510 = vld [vmem:[%s500 + $0x24] sm:$0xf]
    %v511 = vld [vmem:[%s500 + $0x28] sm:$0xf]
    %v512 = vld [vmem:[%s500 + $0x2c] sm:$0xf]
    %v513 = vld [vmem:[%s500 + $0x30] sm:$0xf]
    %v514 = vld [vmem:[%s500 + $0x34] sm:$0xf]
    %v529 = vunpack.c.l.b16 %v501
    %v530 = vunpack.c.l.b16 %v502
    %v531 = vunpack.c.l.b16 %v503
    %v532 = vunpack.c.l.b16 %v504
    %v533 = vunpack.c.l.b16 %v505
    %v534 = vunpack.c.l.b16 %v506
    %v535 = vunpack.c.l.b16 %v507
    %v536 = vunpack.c.l.b16 %v508
    %v537 = vunpack.c.l.b16 %v509
    %v538 = vunpack.c.l.b16 %v510
    %v539 = vunpack.c.l.b16 %v511
    %v540 = vunpack.c.l.b16 %v512
    %v541 = vunpack.c.l.b16 %v513
    %v542 = vunpack.c.l.b16 %v514
    %v543 = vpack.c.b16 %v530, %v529
    %v544 = vpack.c.b16 %v532, %v531
    %v545 = vpack.c.b16 %v534, %v533
    %v546 = vpack.c.b16 %v536, %v535
    %v547 = vpack.c.b16 %v538, %v537
    %v548 = vpack.c.b16 %v540, %v539
    %v549 = vpack.c.b16 %v542, %v541
    %v558 = vsel %vm333, %v499, 0
    %560 = vmatpush.bf16.msra.mxu0 0
    %561 = vmatpush.bf16.msra.mxu0 %v549
    %562 = vmatpush.bf16.msra.mxu0 %v548
    %563 = vmatpush.bf16.msra.mxu0 %v547
    %564 = vmatpush.bf16.msra.mxu0 %v546
    %565 = vmatpush.bf16.msra.mxu0 %v545
    %566 = vmatpush.bf16.msra.mxu0 %v544
    %567 = vmatpush.bf16.msra.mxu0 %v543
    %568 = vmatmul.bf16.gmra.mxu0 %v558
    %v569 = vpop.f32.mrf.mxu0
    %v570 = vadd.f32 0.0, %v569
    %v571 = vpop.f32.mrf.mxu0
    %v572 = vadd.f32 0.0, %v571
    %573 = vdwg.mxu0
    %v574 = vadd.f32 %v491, %v570
    %v575 = vadd.f32 %v493, %v572
    %v576 = vperm.slane %v37, 1
    %v577 = vadd.f32 %v574, %v576
    %v578 = vadd.f32 %v575, %v576
    %v579 = vand.u32 %v301, 7
    %v580 = vand.u32 %v302, 7
    %vm581 = vcmp.lt.s32.totalorder %v579, 7
    %vm582 = vcmp.lt.s32.totalorder %v580, 7
    %v583 = vsel %vm581, 1, 0
    %v584 = vsel %vm582, 1, 0
    %vm585 = vcmp.eq.s32.totalorder %v583, 1
    %vm586 = vcmp.eq.s32.totalorder %v584, 1
    %v587 = vsel %vm585, %v577, 0.0
    %v588 = vsel %vm586, %v578, 0.0
    %v589 = vsel %vm333, %v587, 0.0
    %v590 = vsel %vm333, %v588, 0.0
    %v591 = vadd.f32 %v589, %v590
    %v592 = vrot.slane %v591, 4
    %v593 = vadd.f32 %v591, %v592
    %v594 = vrot.slane %v593, 2
    %v595 = vadd.f32 %v593, %v594
    %v596 = vrot.slane %v595, 1
    %v597 = vadd.f32 %v595, %v596
    %v598 = vmul.f32 %v587, %v587
    %v599 = vmul.f32 %v588, %v588
    %v600 = vsel %vm333, %v598, 0.0
    %v601 = vsel %vm333, %v599, 0.0
    %v602 = vadd.f32 %v600, %v601
    %v603 = vrot.slane %v602, 4
    %v604 = vadd.f32 %v602, %v603
    %v605 = vrot.slane %v604, 2
    %v606 = vadd.f32 %v604, %v605
    %v607 = vrot.slane %v606, 1
    %v608 = vadd.f32 %v606, %v607
    %v609 = vld [vmem:[%s6] sm:$0xff]
    %v610 = vld [vmem:[%s6 + $0x8] sm:$0xff]
    %v611 = vld [vmem:[%s6 + $0x10] sm:$0xff]
    %v612 = vld [vmem:[%s6 + $0x18] sm:$0xff]
    %v613 = vld [vmem:[%s6 + $0x20] sm:$0xff]
    %v614 = vld [vmem:[%s6 + $0x28] sm:$0xff]
    %v615 = vld [vmem:[%s6 + $0x30] sm:$0xff]
    %v616 = vld [vmem:[%s6 + $0x38] sm:$0xff]
    %v617 = vld [vmem:[%s6 + $0x40] sm:$0xff]
    %v618 = vld [vmem:[%s6 + $0x48] sm:$0xff]
    %v619 = vld [vmem:[%s6 + $0x50] sm:$0xff]
    %v620 = vld [vmem:[%s6 + $0x58] sm:$0xff]
    %v621 = vld [vmem:[%s6 + $0x60] sm:$0xff]
    %v622 = vld [vmem:[%s6 + $0x68] sm:$0xff]
    %v624 = vsel %vm333, %v597, 0
    %626 = vmatpush.msra.mxu0 0.0
    %627 = vmatpush.msra.mxu0 0.0
    %628 = vmatpush.msra.mxu0 %v622
    %629 = vmatpush.msra.mxu0 %v621
    %630 = vmatpush.msra.mxu0 %v620
    %631 = vmatpush.msra.mxu0 %v619
    %632 = vmatpush.msra.mxu0 %v618
    %633 = vmatpush.msra.mxu0 %v617
    %634 = vmatpush.msra.mxu0 %v616
    %635 = vmatpush.msra.mxu0 %v615
    %636 = vmatpush.msra.mxu0 %v614
    %637 = vmatpush.msra.mxu0 %v613
    %638 = vmatpush.msra.mxu0 %v612
    %639 = vmatpush.msra.mxu0 %v611
    %640 = vmatpush.msra.mxu0 %v610
    %641 = vmatpush.msra.mxu0 %v609
    %642 = vmatmul.f32.gmra.mxu0 %v624
    %v643 = vpop.f32.mrf.mxu0
    %v644 = vadd.f32 0.0, %v643
    %645 = vdwg.mxu0
    %v646 = vmul.f32 %v644, 0.010204081
    %v648 = vsel %vm333, %v608, 0
    %650 = vmatpush.msra.mxu0 0.0
    %651 = vmatpush.msra.mxu0 0.0
    %652 = vmatpush.msra.mxu0 %v622
    %653 = vmatpush.msra.mxu0 %v621
    %654 = vmatpush.msra.mxu0 %v620
    %655 = vmatpush.msra.mxu0 %v619
    %656 = vmatpush.msra.mxu0 %v618
    %657 = vmatpush.msra.mxu0 %v617
    %658 = vmatpush.msra.mxu0 %v616
    %659 = vmatpush.msra.mxu0 %v615
    %660 = vmatpush.msra.mxu0 %v614
    %661 = vmatpush.msra.mxu0 %v613
    %662 = vmatpush.msra.mxu0 %v612
    %663 = vmatpush.msra.mxu0 %v611
    %664 = vmatpush.msra.mxu0 %v610
    %665 = vmatpush.msra.mxu0 %v609
    %666 = vmatmul.f32.gmra.mxu0 %v648
    %v667 = vpop.f32.mrf.mxu0
    %v668 = vadd.f32 0.0, %v667
    %669 = vdwg.mxu0
    %v670 = vmul.f32 %v668, 0.010204081
    %v671 = vmul.f32 %v646, %v646
    %v672 = vsub.f32 %v670, %v671
    %v673 = vperm.slane %v646, 0
    %v674 = vsub.f32 %v577, %v673
    %v675 = vsub.f32 %v578, %v673
    %v676 = vadd.f32 %v672, 1e-05
    %v677 = vrsqrt.pop %v676
    %v678 = vmul.f32 %v677, %v676
    %v679 = vmul.f32 %v678, %v677
    %v680 = vmul.f32 0.5, %v679
    %v681 = vsub.f32 1.5, %v680
    %v682 = vmul.f32 %v677, %v681
    %vm683 = vweird.f32 %v676
    %vm684 = vweird.f32 %v677
    %vm685 = vmor %vm683, %vm684
    %v686 = vsel %vm685, %v677, %v682
    %v687 = vperm.slane %v686, 0
    %v688 = vmul.f32 %v674, %v687
    %v689 = vmul.f32 %v675, %v687
    %v690 = vperm.slane %v37, 2
    %v691 = vmul.f32 %v688, %v690
    %v692 = vmul.f32 %v689, %v690
    %v693 = vperm.slane %v37, 3
    %v694 = vadd.f32 %v691, %v693
    %v695 = vadd.f32 %v692, %v693
    %v696 = vmax.f32 %v694, 0.0
    %v697 = vmax.f32 %v695, 0.0
    %698 = vst.msk [vmem:[#allocation3] sm:$0xff] %vm333, %v696
    %699 = vst.msk [vmem:[#allocation3 + $0x8] sm:$0xff] %vm333, %v697
    %700 = vst.msk [vmem:[#allocation3 + $0x10] sm:$0xff] %vm333, 0.0
    %v701 = vld [vmem:[#allocation3] ss:$2 sm:$0xff]
    %v702 = vpack.c.bf16 %v701, %v701
    %v703 = vld [vmem:[%s3] sm:$0xf]
    %v704 = vld [vmem:[%s3 + $0x4] sm:$0xf]
    %v705 = vld [vmem:[%s3 + $0x8] sm:$0xf]
    %v706 = vld [vmem:[%s3 + $0xc] sm:$0xf]
    %v707 = vld [vmem:[%s3 + $0x10] sm:$0xf]
    %v708 = vld [vmem:[%s3 + $0x14] sm:$0xf]
    %v709 = vld [vmem:[%s3 + $0x18] sm:$0xf]
    %v710 = vld [vmem:[%s3 + $0x1c] sm:$0xf]
    %v711 = vld [vmem:[%s3 + $0x20] sm:$0xf]
    %v712 = vld [vmem:[%s3 + $0x24] sm:$0xf]
    %v713 = vld [vmem:[%s3 + $0x28] sm:$0xf]
    %v714 = vld [vmem:[%s3 + $0x2c] sm:$0xf]
    %v715 = vld [vmem:[%s3 + $0x30] sm:$0xf]
    %v716 = vld [vmem:[%s3 + $0x34] sm:$0xf]
    %s717 = scalar_lea.vmem [#allocation3], 1
    %v718 = vld [vmem:[%s717] ss:$2 sm:$0xff]
    %v719 = vpack.c.bf16 %v718, %v718
    %s720 = scalar_lea.vmem %s3, 56
    %v721 = vld [vmem:[%s720] sm:$0xf]
    %v722 = vld [vmem:[%s720 + $0x4] sm:$0xf]
    %v723 = vld [vmem:[%s720 + $0x8] sm:$0xf]
    %v724 = vld [vmem:[%s720 + $0xc] sm:$0xf]
    %v725 = vld [vmem:[%s720 + $0x10] sm:$0xf]
    %v726 = vld [vmem:[%s720 + $0x14] sm:$0xf]
    %v727 = vld [vmem:[%s720 + $0x18] sm:$0xf]
    %v728 = vld [vmem:[%s720 + $0x1c] sm:$0xf]
    %v729 = vld [vmem:[%s720 + $0x20] sm:$0xf]
    %v730 = vld [vmem:[%s720 + $0x24] sm:$0xf]
    %v731 = vld [vmem:[%s720 + $0x28] sm:$0xf]
    %v732 = vld [vmem:[%s720 + $0x2c] sm:$0xf]
    %v733 = vld [vmem:[%s720 + $0x30] sm:$0xf]
    %v734 = vld [vmem:[%s720 + $0x34] sm:$0xf]
    %v749 = vunpack.c.l.b16 %v721
    %v750 = vunpack.c.l.b16 %v722
    %v751 = vunpack.c.l.b16 %v723
    %v752 = vunpack.c.l.b16 %v724
    %v753 = vunpack.c.l.b16 %v725
    %v754 = vunpack.c.l.b16 %v726
    %v755 = vunpack.c.l.b16 %v727
    %v756 = vunpack.c.l.b16 %v728
    %v757 = vunpack.c.l.b16 %v729
    %v758 = vunpack.c.l.b16 %v730
    %v759 = vunpack.c.l.b16 %v731
    %v760 = vunpack.c.l.b16 %v732
    %v761 = vunpack.c.l.b16 %v733
    %v762 = vunpack.c.l.b16 %v734
    %v763 = vpack.c.b16 %v750, %v749
    %v764 = vpack.c.b16 %v752, %v751
    %v765 = vpack.c.b16 %v754, %v753
    %v766 = vpack.c.b16 %v756, %v755
    %v767 = vpack.c.b16 %v758, %v757
    %v768 = vpack.c.b16 %v760, %v759
    %v769 = vpack.c.b16 %v762, %v761
    %v778 = vsel %vm333, %v719, 0
    %780 = vmatpush.bf16.msra.mxu0 0
    %781 = vmatpush.bf16.msra.mxu0 %v769
    %782 = vmatpush.bf16.msra.mxu0 %v768
    %783 = vmatpush.bf16.msra.mxu0 %v767
    %784 = vmatpush.bf16.msra.mxu0 %v766
    %785 = vmatpush.bf16.msra.mxu0 %v765
    %786 = vmatpush.bf16.msra.mxu0 %v764
    %787 = vmatpush.bf16.msra.mxu0 %v763
    %788 = vmatmul.bf16.gmra.mxu0 %v778
    %v789 = vpop.f32.mrf.mxu0
    %v790 = vadd.f32 0.0, %v789
    %v791 = vpop.f32.mrf.mxu0
    %792 = vdwg.mxu0
    %v807 = vunpack.c.l.b16 %v703
    %v808 = vunpack.c.l.b16 %v704
    %v809 = vunpack.c.l.b16 %v705
    %v810 = vunpack.c.l.b16 %v706
    %v811 = vunpack.c.l.b16 %v707
    %v812 = vunpack.c.l.b16 %v708
    %v813 = vunpack.c.l.b16 %v709
    %v814 = vunpack.c.l.b16 %v710
    %v815 = vunpack.c.l.b16 %v711
    %v816 = vunpack.c.l.b16 %v712
    %v817 = vunpack.c.l.b16 %v713
    %v818 = vunpack.c.l.b16 %v714
    %v819 = vunpack.c.l.b16 %v715
    %v820 = vunpack.c.l.b16 %v716
    %v821 = vpack.c.b16 %v808, %v807
    %v822 = vpack.c.b16 %v810, %v809
    %v823 = vpack.c.b16 %v812, %v811
    %v824 = vpack.c.b16 %v814, %v813
    %v825 = vpack.c.b16 %v816, %v815
    %v826 = vpack.c.b16 %v818, %v817
    %v827 = vpack.c.b16 %v820, %v819
    %v836 = vsel %vm333, %v702, 0
    %838 = vmatpush.bf16.msra.mxu0 0
    %839 = vmatpush.bf16.msra.mxu0 %v827
    %840 = vmatpush.bf16.msra.mxu0 %v826
    %841 = vmatpush.bf16.msra.mxu0 %v825
    %842 = vmatpush.bf16.msra.mxu0 %v824
    %843 = vmatpush.bf16.msra.mxu0 %v823
    %844 = vmatpush.bf16.msra.mxu0 %v822
    %845 = vmatpush.bf16.msra.mxu0 %v821
    %846 = vmatmul.bf16.gmra.mxu0 %v836
    %v847 = vpop.f32.mrf.mxu0
    %v848 = vadd.f32 %v790, %v847
    %v849 = vpop.f32.mrf.mxu0
    %850 = vdwg.mxu0
    %s851 = scalar_lea.vmem [#allocation3], 2
    %v852 = vld [vmem:[%s851] ss:$2 sm:$0xff]
    %v853 = vpack.c.bf16 %v852, %v852
    %s854 = scalar_lea.vmem %s3, 112
    %v855 = vld [vmem:[%s854] sm:$0xf]
    %v856 = vld [vmem:[%s854 + $0x4] sm:$0xf]
    %v857 = vld [vmem:[%s854 + $0x8] sm:$0xf]
    %v858 = vld [vmem:[%s854 + $0xc] sm:$0xf]
    %v859 = vld [vmem:[%s854 + $0x10] sm:$0xf]
    %v860 = vld [vmem:[%s854 + $0x14] sm:$0xf]
    %v861 = vld [vmem:[%s854 + $0x18] sm:$0xf]
    %v862 = vld [vmem:[%s854 + $0x1c] sm:$0xf]
    %v863 = vld [vmem:[%s854 + $0x20] sm:$0xf]
    %v864 = vld [vmem:[%s854 + $0x24] sm:$0xf]
    %v865 = vld [vmem:[%s854 + $0x28] sm:$0xf]
    %v866 = vld [vmem:[%s854 + $0x2c] sm:$0xf]
    %v867 = vld [vmem:[%s854 + $0x30] sm:$0xf]
    %v868 = vld [vmem:[%s854 + $0x34] sm:$0xf]
    %v883 = vunpack.c.l.b16 %v855
    %v884 = vunpack.c.l.b16 %v856
    %v885 = vunpack.c.l.b16 %v857
    %v886 = vunpack.c.l.b16 %v858
    %v887 = vunpack.c.l.b16 %v859
    %v888 = vunpack.c.l.b16 %v860
    %v889 = vunpack.c.l.b16 %v861
    %v890 = vunpack.c.l.b16 %v862
    %v891 = vunpack.c.l.b16 %v863
    %v892 = vunpack.c.l.b16 %v864
    %v893 = vunpack.c.l.b16 %v865
    %v894 = vunpack.c.l.b16 %v866
    %v895 = vunpack.c.l.b16 %v867
    %v896 = vunpack.c.l.b16 %v868
    %v897 = vpack.c.b16 %v884, %v883
    %v898 = vpack.c.b16 %v886, %v885
    %v899 = vpack.c.b16 %v888, %v887
    %v900 = vpack.c.b16 %v890, %v889
    %v901 = vpack.c.b16 %v892, %v891
    %v902 = vpack.c.b16 %v894, %v893
    %v903 = vpack.c.b16 %v896, %v895
    %v912 = vsel %vm333, %v853, 0
    %914 = vmatpush.bf16.msra.mxu0 0
    %915 = vmatpush.bf16.msra.mxu0 %v903
    %916 = vmatpush.bf16.msra.mxu0 %v902
    %917 = vmatpush.bf16.msra.mxu0 %v901
    %918 = vmatpush.bf16.msra.mxu0 %v900
    %919 = vmatpush.bf16.msra.mxu0 %v899
    %920 = vmatpush.bf16.msra.mxu0 %v898
    %921 = vmatpush.bf16.msra.mxu0 %v897
    %922 = vmatmul.bf16.gmra.mxu0 %v912
    %v923 = vpop.f32.mrf.mxu0
    %v924 = vadd.f32 0.0, %v923
    %v925 = vpop.f32.mrf.mxu0
    %926 = vdwg.mxu0
    %v927 = vadd.f32 %v848, %v924
    %v928 = vperm.slane %v37, 4
    %v929 = vadd.f32 %v927, %v928
    %v930 = vmax.f32 %v929, 0.0
    %vm931 = vcmask 785408
    %932 = vst.msk [vmem:[#allocation4] sm:$0xff] %vm931, %v930
    %v933 = vld [vmem:[#allocation4] ss:$4 sm:$0x3]
    %v934 = vpack.c.bf16 %v933, %v933
    %v935 = vld [vmem:[%s4] sm:$0xf]
    %v936 = vld [vmem:[%s4 + $0x4] sm:$0xf]
    %v937 = vld [vmem:[%s4 + $0x8] sm:$0xf]
    %v938 = vld [vmem:[%s4 + $0xc] sm:$0xf]
    %v939 = vld [vmem:[%s4 + $0x10] sm:$0xf]
    %v940 = vld [vmem:[%s4 + $0x14] sm:$0xf]
    %v941 = vld [vmem:[%s4 + $0x18] sm:$0xf]
    %v942 = vld [vmem:[%s4 + $0x1c] sm:$0xf]
    %v943 = vld [vmem:[%s4 + $0x20] sm:$0xf]
    %v944 = vld [vmem:[%s4 + $0x24] sm:$0xf]
    %v945 = vld [vmem:[%s4 + $0x28] sm:$0xf]
    %v946 = vld [vmem:[%s4 + $0x2c] sm:$0xf]
    %s947 = scalar_lea.vmem [#allocation4], 1
    %v948 = vld [vmem:[%s947] ss:$4 sm:$0x3]
    %v949 = vpack.c.bf16 %v948, %v948
    %s950 = scalar_lea.vmem %s4, 48
    %v951 = vld [vmem:[%s950] sm:$0xf]
    %v952 = vld [vmem:[%s950 + $0x4] sm:$0xf]
    %v953 = vld [vmem:[%s950 + $0x8] sm:$0xf]
    %v954 = vld [vmem:[%s950 + $0xc] sm:$0xf]
    %v955 = vld [vmem:[%s950 + $0x10] sm:$0xf]
    %v956 = vld [vmem:[%s950 + $0x14] sm:$0xf]
    %v957 = vld [vmem:[%s950 + $0x18] sm:$0xf]
    %v958 = vld [vmem:[%s950 + $0x1c] sm:$0xf]
    %v959 = vld [vmem:[%s950 + $0x20] sm:$0xf]
    %v960 = vld [vmem:[%s950 + $0x24] sm:$0xf]
    %v961 = vld [vmem:[%s950 + $0x28] sm:$0xf]
    %v962 = vld [vmem:[%s950 + $0x2c] sm:$0xf]
    %v975 = vunpack.c.l.b16 %v951
    %v976 = vunpack.c.l.b16 %v952
    %v977 = vunpack.c.l.b16 %v953
    %v978 = vunpack.c.l.b16 %v954
    %v979 = vunpack.c.l.b16 %v955
    %v980 = vunpack.c.l.b16 %v956
    %v981 = vunpack.c.l.b16 %v957
    %v982 = vunpack.c.l.b16 %v958
    %v983 = vunpack.c.l.b16 %v959
    %v984 = vunpack.c.l.b16 %v960
    %v985 = vunpack.c.l.b16 %v961
    %v986 = vunpack.c.l.b16 %v962
    %v987 = vpack.c.b16 %v976, %v975
    %v988 = vpack.c.b16 %v978, %v977
    %v989 = vpack.c.b16 %v980, %v979
    %v990 = vpack.c.b16 %v982, %v981
    %v991 = vpack.c.b16 %v984, %v983
    %v992 = vpack.c.b16 %v986, %v985
    %v1000 = vsel %vm931, %v949, 0
    %1002 = vmatpush.bf16.msra.mxu0 0
    %1003 = vmatpush.bf16.msra.mxu0 0
    %1004 = vmatpush.bf16.msra.mxu0 %v992
    %1005 = vmatpush.bf16.msra.mxu0 %v991
    %1006 = vmatpush.bf16.msra.mxu0 %v990
    %1007 = vmatpush.bf16.msra.mxu0 %v989
    %1008 = vmatpush.bf16.msra.mxu0 %v988
    %1009 = vmatpush.bf16.msra.mxu0 %v987
    %1010 = vmatmul.bf16.gmra.mxu0 %v1000
    %v1011 = vpop.f32.mrf.mxu0
    %v1012 = vadd.f32 0.0, %v1011
    %v1013 = vpop.f32.mrf.mxu0
    %1014 = vdwg.mxu0
    %v1027 = vunpack.c.l.b16 %v935
    %v1028 = vunpack.c.l.b16 %v936
    %v1029 = vunpack.c.l.b16 %v937
    %v1030 = vunpack.c.l.b16 %v938
    %v1031 = vunpack.c.l.b16 %v939
    %v1032 = vunpack.c.l.b16 %v940
    %v1033 = vunpack.c.l.b16 %v941
    %v1034 = vunpack.c.l.b16 %v942
    %v1035 = vunpack.c.l.b16 %v943
    %v1036 = vunpack.c.l.b16 %v944
    %v1037 = vunpack.c.l.b16 %v945
    %v1038 = vunpack.c.l.b16 %v946
    %v1039 = vpack.c.b16 %v1028, %v1027
    %v1040 = vpack.c.b16 %v1030, %v1029
    %v1041 = vpack.c.b16 %v1032, %v1031
    %v1042 = vpack.c.b16 %v1034, %v1033
    %v1043 = vpack.c.b16 %v1036, %v1035
    %v1044 = vpack.c.b16 %v1038, %v1037
    %v1052 = vsel %vm931, %v934, 0
    %1054 = vmatpush.bf16.msra.mxu0 0
    %1055 = vmatpush.bf16.msra.mxu0 0
    %1056 = vmatpush.bf16.msra.mxu0 %v1044
    %1057 = vmatpush.bf16.msra.mxu0 %v1043
    %1058 = vmatpush.bf16.msra.mxu0 %v1042
    %1059 = vmatpush.bf16.msra.mxu0 %v1041
    %1060 = vmatpush.bf16.msra.mxu0 %v1040
    %1061 = vmatpush.bf16.msra.mxu0 %v1039
    %1062 = vmatmul.bf16.gmra.mxu0 %v1052
    %v1063 = vpop.f32.mrf.mxu0
    %v1064 = vadd.f32 %v1012, %v1063
    %v1065 = vpop.f32.mrf.mxu0
    %1066 = vdwg.mxu0
    %s1067 = scalar_lea.vmem [#allocation4], 2
    %v1068 = vld [vmem:[%s1067] ss:$4 sm:$0x3]
    %v1069 = vpack.c.bf16 %v1068, %v1068
    %s1070 = scalar_lea.vmem %s4, 96
    %v1071 = vld [vmem:[%s1070] sm:$0xf]
    %v1072 = vld [vmem:[%s1070 + $0x4] sm:$0xf]
    %v1073 = vld [vmem:[%s1070 + $0x8] sm:$0xf]
    %v1074 = vld [vmem:[%s1070 + $0xc] sm:$0xf]
    %v1075 = vld [vmem:[%s1070 + $0x10] sm:$0xf]
    %v1076 = vld [vmem:[%s1070 + $0x14] sm:$0xf]
    %v1077 = vld [vmem:[%s1070 + $0x18] sm:$0xf]
    %v1078 = vld [vmem:[%s1070 + $0x1c] sm:$0xf]
    %v1079 = vld [vmem:[%s1070 + $0x20] sm:$0xf]
    %v1080 = vld [vmem:[%s1070 + $0x24] sm:$0xf]
    %v1081 = vld [vmem:[%s1070 + $0x28] sm:$0xf]
    %v1082 = vld [vmem:[%s1070 + $0x2c] sm:$0xf]
    %v1095 = vunpack.c.l.b16 %v1071
    %v1096 = vunpack.c.l.b16 %v1072
    %v1097 = vunpack.c.l.b16 %v1073
    %v1098 = vunpack.c.l.b16 %v1074
    %v1099 = vunpack.c.l.b16 %v1075
    %v1100 = vunpack.c.l.b16 %v1076
    %v1101 = vunpack.c.l.b16 %v1077
    %v1102 = vunpack.c.l.b16 %v1078
    %v1103 = vunpack.c.l.b16 %v1079
    %v1104 = vunpack.c.l.b16 %v1080
    %v1105 = vunpack.c.l.b16 %v1081
    %v1106 = vunpack.c.l.b16 %v1082
    %v1107 = vpack.c.b16 %v1096, %v1095
    %v1108 = vpack.c.b16 %v1098, %v1097
    %v1109 = vpack.c.b16 %v1100, %v1099
    %v1110 = vpack.c.b16 %v1102, %v1101
    %v1111 = vpack.c.b16 %v1104, %v1103
    %v1112 = vpack.c.b16 %v1106, %v1105
    %v1120 = vsel %vm931, %v1069, 0
    %1122 = vmatpush.bf16.msra.mxu0 0
    %1123 = vmatpush.bf16.msra.mxu0 0
    %1124 = vmatpush.bf16.msra.mxu0 %v1112
    %1125 = vmatpush.bf16.msra.mxu0 %v1111
    %1126 = vmatpush.bf16.msra.mxu0 %v1110
    %1127 = vmatpush.bf16.msra.mxu0 %v1109
    %1128 = vmatpush.bf16.msra.mxu0 %v1108
    %1129 = vmatpush.bf16.msra.mxu0 %v1107
    %1130 = vmatmul.bf16.gmra.mxu0 %v1120
    %v1131 = vpop.f32.mrf.mxu0
    %v1132 = vadd.f32 0.0, %v1131
    %v1133 = vpop.f32.mrf.mxu0
    %1134 = vdwg.mxu0
    %v1135 = vadd.f32 %v1064, %v1132
    %v1136 = vperm.slane %v37, 5
    %v1137 = vadd.f32 %v1135, %v1136
    %v1138 = vmax.f32 %v1137, 0.0
    %v1139 = vpack.c.bf16 %v1138, %v1138
    %v1140 = vld [vmem:[%s5] sm:$0xf]
    %v1141 = vld [vmem:[%s5 + $0x4] sm:$0xf]
    %v1142 = vld [vmem:[%s5 + $0x8] sm:$0xf]
    %v1143 = vld [vmem:[%s5 + $0xc] sm:$0xf]
    %v1144 = vld [vmem:[%s5 + $0x10] sm:$0xf]
    %v1145 = vld [vmem:[%s5 + $0x14] sm:$0xf]
    %v1146 = vld [vmem:[%s5 + $0x18] sm:$0xf]
    %v1147 = vld [vmem:[%s5 + $0x1c] sm:$0xf]
    %v1148 = vld [vmem:[%s5 + $0x20] sm:$0xf]
    %v1149 = vld [vmem:[%s5 + $0x24] sm:$0xf]
    %v1150 = vld [vmem:[%s5 + $0x28] sm:$0xf]
    %v1151 = vld [vmem:[%s5 + $0x2c] sm:$0xf]
    %v1152 = vld [vmem:[%s5 + $0x30] sm:$0xf]
    %v1153 = vld [vmem:[%s5 + $0x34] sm:$0xf]
    %v1154 = vld [vmem:[%s5 + $0x38] sm:$0xf]
    %v1155 = vld [vmem:[%s5 + $0x3c] sm:$0xf]
    %v1156 = vperm.slane %v37, 6
    %v1173 = vunpack.c.l.b16 %v1140
    %v1174 = vunpack.c.l.b16 %v1141
    %v1175 = vunpack.c.l.b16 %v1142
    %v1176 = vunpack.c.l.b16 %v1143
    %v1177 = vunpack.c.l.b16 %v1144
    %v1178 = vunpack.c.l.b16 %v1145
    %v1179 = vunpack.c.l.b16 %v1146
    %v1180 = vunpack.c.l.b16 %v1147
    %v1181 = vunpack.c.l.b16 %v1148
    %v1182 = vunpack.c.l.b16 %v1149
    %v1183 = vunpack.c.l.b16 %v1150
    %v1184 = vunpack.c.l.b16 %v1151
    %v1185 = vunpack.c.l.b16 %v1152
    %v1186 = vunpack.c.l.b16 %v1153
    %v1187 = vunpack.c.l.b16 %v1154
    %v1188 = vunpack.c.l.b16 %v1155
    %v1189 = vpack.c.b16 %v1174, %v1173
    %v1190 = vpack.c.b16 %v1176, %v1175
    %v1191 = vpack.c.b16 %v1178, %v1177
    %v1192 = vpack.c.b16 %v1180, %v1179
    %v1193 = vpack.c.b16 %v1182, %v1181
    %v1194 = vpack.c.b16 %v1184, %v1183
    %v1195 = vpack.c.b16 %v1186, %v1185
    %v1196 = vpack.c.b16 %v1188, %v1187
    %1205 = vmatpush.bf16.msra.mxu0 %v1196
    %1206 = vmatpush.bf16.msra.mxu0 %v1195
    %1207 = vmatpush.bf16.msra.mxu0 %v1194
    %1208 = vmatpush.bf16.msra.mxu0 %v1193
    %1209 = vmatpush.bf16.msra.mxu0 %v1192
    %1210 = vmatpush.bf16.msra.mxu0 %v1191
    %1211 = vmatpush.bf16.msra.mxu0 %v1190
    %1212 = vmatpush.bf16.msra.mxu0 %v1189
    %1213 = vmatmul.bf16.gmra.mxu0 %v1139
    %v1214 = vpop.f32.mrf.mxu0
    %v1215 = vadd.f32 %v1156, %v1214
    %v1216 = vpop.f32.mrf.mxu0
    %1217 = vdwg.mxu0
    %v1218 = vmul.f32 %v1215, 1.442695
    %v1219 = vpow.pop %v1218
    %v1220 = vld [vmem:[%s8] sm:$0x3]
    %1222 = vrot.lane.b32.xlu0 %v1220, 8
    %v1223 = vpop.permute.xlu0 %1222
    %v1225 = vmul.f32 %v1219, %v1223
    %1227 = vrot.lane.b32.xlu0 %v1225, 120
    %v1228 = vpop.permute.xlu0 %1227
    %v1230 = vadd.f32 %v1215, %v1228
    %vm1231 = vcmask 58368
    %1232 = vst.msk [vmem:[#allocation5] sm:$0x3] %vm1231, %v1230
    %v1233 = vmul.f32 %v1219, %v1219
    %v1234 = vmul.f32 %v1215, %v1215
    %1236 = vrot.lane.b32.xlu0 %v1234, 8
    %v1237 = vpop.permute.xlu0 %1236
    %v1239 = vadd.f32 %v1233, %v1237
    %v1240 = vsub.f32 %v1239, %v1215
    %v1241 = vsub.f32 %v1240, 0.5
    %1243 = vrot.lane.b32.xlu0 %v1241, 120
    %v1244 = vpop.permute.xlu0 %1243
    %v1246 = vsel %vm1231, %v1244, 0.0
    %1247 = vadd.xlane.f32.xlu0 %v1246
    %v1248 = vpop.xlane.xlu0 %1247
    %v1249 = vrot.slane %v1248, 4
    %v1250 = vadd.f32 %v1248, %v1249
    %v1251 = vrot.slane %v1250, 2
    %v1252 = vadd.f32 %v1250, %v1251
    %v1253 = vrot.slane %v1252, 1
    %v1254 = vadd.f32 %v1252, %v1253
    %s1255 = vtos %v1254
    %v1256 = vstv %s1255
    %vm1257 = vcmask 0
    %1258 = vst.msk [vmem:[#allocation7] sm:$0x1] %vm1257, %v1256
    // Predicated region
    $region38: #{variational_encoder_forward.1} parent=1 // pred_check
      _
    $region39: #{variational_encoder_forward.1} parent=1 // pred_check_branch
      %1260 = sbr.rel (0) target = $region41
    $region40: #{variational_encoder_forward.1} parent=1 // pred_region
      %1262 = vsyncadd [#allocation6], 0
      %s1264 = sshll.u32 [#allocation5], 4
      %s1265 = int_to_ptr.vmem [resolvable:$true] %s1264
      %s1266 = sshll.u32 %s9, 4
      %s1267 = int_to_ptr.hbm [resolvable:$true] %s1266
      %1269 = dma.vmem_to_hbm [thread:$0]  %s1265, 32, %s1267, [#allocation6]
    $region41: #{variational_encoder_forward.1} parent=1 // pred_fallthru
      _
    // Predicated region
    $region42: #{variational_encoder_forward.1} parent=1 // pred_check
      _
    $region43: #{variational_encoder_forward.1} parent=1 // pred_check_branch
      %1271 = sbr.rel (0) target = $region45
    $region44: #{variational_encoder_forward.1} parent=1 // pred_region
      %1273 = vsyncadd [#allocation8], 0
      %s1275 = sshll.u32 [#allocation7], 4
      %s1276 = int_to_ptr.vmem [resolvable:$true] %s1275
      %s1277 = sshll.u32 %s10, 4
      %s1278 = int_to_ptr.hbm [resolvable:$true] %s1277
      %1280 = dma.vmem_to_hbm [thread:$0]  %s1276, 16, %s1278, [#allocation8]
    $region45: #{variational_encoder_forward.1} parent=1 // pred_fallthru
      _
    // Predicated region
    $region46: #{variational_encoder_forward.1} parent=1 // pred_check
      _
    $region47: #{variational_encoder_forward.1} parent=1 // pred_check_branch
      %1282 = sbr.rel (0) target = $region49
    $region48: #{variational_encoder_forward.1} parent=1 // pred_region
      %1284 = dma.done [#allocation6], 32
    $region49: #{variational_encoder_forward.1} parent=1 // pred_fallthru
      _
    // Predicated region
    $region50: #{variational_encoder_forward.1} parent=1 // pred_check
      _
    $region51: #{variational_encoder_forward.1} parent=1 // pred_check_branch
      %1286 = sbr.rel (0) target = $region53
    $region52: #{variational_encoder_forward.1} parent=1 // pred_region
      %1288 = dma.done [#allocation8], 16
    $region53: #{variational_encoder_forward.1} parent=1 // pred_fallthru
      _
    %1289 = vsyncpa [#allocation6], 1
    %1290 = vsyncpa [#allocation8], 1

</llo_original>
